<compile_context>
chip_gen: v7x
topology: tpu7x:2x2x1
jax: 0.10.0
libtpu: 0.0.40
codegen_flags: <defaults>
</compile_context>

<pallas_src>
import jax
import jax.numpy as jnp
from jax.experimental import pallas as pl
from jax.experimental.pallas import tpu as pltpu

IN_FEATURES = 400
EMB_CLASSES = 4
EMB_DIM = 10
H1, H2, H3 = 512, 256, 128


def _leaky_relu(z, slope=0.2):
    return jnp.where(z >= 0, z, slope * z)


def _round_up(n, m):
    return ((n + m - 1) // m) * m


def discriminator_kernel(x_ref, rb_ref, w1_ref, w2_ref, b2_ref,
                         w3_ref, b3_ref, w4t_ref, b4_ref, o_ref):
    """One batch tile: x (TB,400) bf16 -> sigmoid outputs stored as (1,1,TB) f32."""
    # Layer 1: clean K=400 bf16 matmul, f32 accumulation, per-class bias (b1 folded in).
    h = jnp.dot(x_ref[...], w1_ref[...], preferred_element_type=jnp.float32)
    h = _leaky_relu(h + rb_ref[...])                              # (TB, 512) f32
    # Layer 2.
    h = jnp.dot(h.astype(jnp.bfloat16), w2_ref[...],
                preferred_element_type=jnp.float32)
    h = _leaky_relu(h + b2_ref[...])                              # (TB, 256) f32
    # Layer 3.
    h = jnp.dot(h.astype(jnp.bfloat16), w3_ref[...],
                preferred_element_type=jnp.float32)
    h = _leaky_relu(h + b3_ref[...])                              # (TB, 128) f32
    # Layer 4, lane-dense: (1,128) contracted with (TB,128) over K=128 -> (1, TB).
    z = jax.lax.dot_general(
        w4t_ref[...], h.astype(jnp.bfloat16),
        dimension_numbers=(((1,), (1,)), ((), ())),
        preferred_element_type=jnp.float32)
    z = z + b4_ref[0]                                             # scalar bias from SMEM
    o_ref[0] = jax.nn.sigmoid(z)                                  # dense (1, TB) store


def init_params(key):
    """Deterministic parameter init mirroring the PyTorch module's shapes (f32 masters)."""
    dims = [(IN_FEATURES + EMB_DIM, H1), (H1, H2), (H2, H3), (H3, 1)]
    keys = jax.random.split(key, 1 + 2 * len(dims))
    params = {}
    # Embedding(4, 10): N(0, 1) like nn.Embedding default.
    params["emb"] = jax.random.normal(keys[0], (EMB_CLASSES, EMB_DIM), dtype=jnp.float32)
    for i, (fan_in, fan_out) in enumerate(dims):
        bound = 1.0 / jnp.sqrt(fan_in)
        params[f"w{i+1}"] = jax.random.uniform(
            keys[1 + 2 * i], (fan_in, fan_out), jnp.float32, -bound, bound)
        params[f"b{i+1}"] = jax.random.uniform(
            keys[2 + 2 * i], (1, fan_out), jnp.float32, -bound, bound)
    return params


def discriminator_forward(params, x, labels, *, block_b=256):
    B = x.shape[0]

    # ---- glue (plain JAX): fold Embedding + concat into a per-row layer-1 bias.
    #   concat([x, emb[l]]) @ W1 + b1 == x @ W1[:400] + (emb[l] @ W1[400:] + b1)
    t_cls = params["emb"] @ params["w1"][IN_FEATURES:, :] + params["b1"]   # (4, 512) f32
    row_bias = jnp.take(t_cls, labels, axis=0)                             # (B, 512) f32

    # ---- batch tiling (pad B up to a multiple of the tile).
    tb = min(block_b, _round_up(B, 8))
    b_pad = _round_up(B, tb)
    n_tiles = b_pad // tb
    pad = b_pad - B

    x_p = jnp.pad(x.astype(jnp.bfloat16), ((0, pad), (0, 0)))     # (B_pad, 400) bf16
    rb_p = jnp.pad(row_bias, ((0, pad), (0, 0)))                  # (B_pad, 512) f32

    # ---- bf16 weights (halves HBM traffic; matmuls still accumulate in f32).
    w1a = params["w1"][:IN_FEATURES, :].astype(jnp.bfloat16)      # (400, 512)
    w2 = params["w2"].astype(jnp.bfloat16)                        # (512, 256)
    w3 = params["w3"].astype(jnp.bfloat16)                        # (256, 128)
    w4t = params["w4"].T.astype(jnp.bfloat16)                     # (1, 128)
    b2 = params["b2"]                                             # (1, 256) f32
    b3 = params["b3"]                                             # (1, 128) f32
    b4 = params["b4"].reshape((1,))                               # (1,) f32 -> SMEM

    flops = 2 * b_pad * (IN_FEATURES * H1 + H1 * H2 + H2 * H3 + H3 * 1)
    bytes_accessed = (
        2 * (w1a.size + w2.size + w3.size + w4t.size)             # bf16 weights
        + 2 * x_p.size + 4 * rb_p.size                            # streamed per-row data
        + 4 * (b2.size + b3.size + b4.size)                       # small biases
        + 4 * b_pad)                                              # output
    cost = pl.CostEstimate(flops=flops, transcendentals=b_pad,
                           bytes_accessed=bytes_accessed)

    const = lambda i: (0, 0)   # same block every grid step -> weight stays resident
    grid_spec = pltpu.PrefetchScalarGridSpec(
        num_scalar_prefetch=0,
        grid=(n_tiles,),
        in_specs=[
            pl.BlockSpec((tb, IN_FEATURES), lambda i: (i, 0)),    # x tile
            pl.BlockSpec((tb, H1), lambda i: (i, 0)),             # per-row class bias
            pl.BlockSpec((IN_FEATURES, H1), const),               # W1[:400] (resident)
            pl.BlockSpec((H1, H2), const),                        # W2
            pl.BlockSpec((1, H2), const),                         # b2
            pl.BlockSpec((H2, H3), const),                        # W3
            pl.BlockSpec((1, H3), const),                         # b3
            pl.BlockSpec((1, H3), const),                         # W4^T
            pl.BlockSpec(memory_space=pltpu.MemorySpace.SMEM),    # b4 scalar
        ],
        out_specs=pl.BlockSpec((1, 1, tb), lambda i: (i, 0, 0)),  # lane-dense output row
    )

    out = pl.pallas_call(
        discriminator_kernel,
        out_shape=jax.ShapeDtypeStruct((n_tiles, 1, tb), jnp.float32),
        grid_spec=grid_spec,
        compiler_params=pltpu.CompilerParams(
            dimension_semantics=("parallel",)),
        cost_estimate=cost,
    )(x_p, rb_p, w1a, w2, b2, w3, b3, w4t, b4)

    out = out.reshape(b_pad)[:B]
    return jnp.squeeze(out)   # matches torch .squeeze() (scalar if B == 1)


def _reference_forward_f32(params, x, labels):
    """Exact f32 reference of the PyTorch module (eval mode)."""
    c = jnp.take(params["emb"], labels, axis=0)
    h = jnp.concatenate([x, c], axis=1)
    h = _leaky_relu(h @ params["w1"] + params["b1"])
    h = _leaky_relu(h @ params["w2"] + params["b2"])
    h = _leaky_relu(h @ params["w3"] + params["b3"])
    return jnp.squeeze(jax.nn.sigmoid(h @ params["w4"] + params["b4"]), axis=-1)


def _reference_forward_bf16(params, x, labels):
    """Plain-JAX mirror of the kernel's bf16-weight / f32-accumulate math."""
    t_cls = params["emb"] @ params["w1"][IN_FEATURES:, :] + params["b1"]
    rb = jnp.take(t_cls, labels, axis=0)
    h = jnp.dot(x.astype(jnp.bfloat16),
                params["w1"][:IN_FEATURES, :].astype(jnp.bfloat16),
                preferred_element_type=jnp.float32)
    h = _leaky_relu(h + rb)
    h = jnp.dot(h.astype(jnp.bfloat16), params["w2"].astype(jnp.bfloat16),
                preferred_element_type=jnp.float32)
    h = _leaky_relu(h + params["b2"])
    h = jnp.dot(h.astype(jnp.bfloat16), params["w3"].astype(jnp.bfloat16),
                preferred_element_type=jnp.float32)
    h = _leaky_relu(h + params["b3"])
    z = jnp.dot(h.astype(jnp.bfloat16), params["w4"].astype(jnp.bfloat16),
                preferred_element_type=jnp.float32) + params["b4"]
    return jnp.squeeze(jax.nn.sigmoid(z), axis=-1)


if __name__ == "__main__":
    key = jax.random.PRNGKey(0)
    k_param, k_x, k_lab = jax.random.split(key, 3)

    B = 2
    params = init_params(k_param)
    x = jax.random.normal(k_x, (B, IN_FEATURES), dtype=jnp.float32)        # flattened image
    labels = jax.random.randint(k_lab, (B,), 0, EMB_CLASSES, dtype=jnp.int32)

    out = jax.block_until_ready(discriminator_forward(params, x, labels))
    assert out.shape == (B,)

    ref_bf16 = _reference_forward_bf16(params, x, labels)   # mirrors kernel precision
    ref_f32 = _reference_forward_f32(params, x, labels)     # exact module semantics
    assert jnp.allclose(out, ref_bf16, atol=2e-3, rtol=2e-3), (out, ref_bf16)
    assert jnp.allclose(out, ref_f32, atol=5e-2, rtol=5e-2), (out, ref_f32)
    print("KERNEL_OK")
</pallas_src>

<mosaic_0001>
module attributes {stable_mosaic.version = 11 : i64} {
  func.func @discriminator_kernel(%arg0: i32, %arg1: memref<8x400xbf16, #tpu.memory_space<vmem>>, %arg2: memref<8x512xf32, #tpu.memory_space<vmem>>, %arg3: memref<400x512xbf16, #tpu.memory_space<vmem>>, %arg4: memref<512x256xbf16, #tpu.memory_space<vmem>>, %arg5: memref<1x256xf32, #tpu.memory_space<vmem>>, %arg6: memref<256x128xbf16, #tpu.memory_space<vmem>>, %arg7: memref<1x128xf32, #tpu.memory_space<vmem>>, %arg8: memref<1x128xbf16, #tpu.memory_space<vmem>>, %arg9: memref<1xf32, #tpu.memory_space<smem>>, %arg10: memref<1x1x8xf32, #tpu.memory_space<vmem>>) attributes {dimension_semantics = [#tpu.dimension_semantics<parallel>], iteration_bounds = array<i64: 1>, scalar_prefetch = 0 : i64, scratch_operands = 0 : i64, tpu.core_type = #tpu.core_type<tc>, window_params = [{transform_indices = @transform_0, window_bounds = array<i64: 8, 400>}, {transform_indices = @transform_1, window_bounds = array<i64: 8, 512>}, {pipeline_mode = #tpu.pipeline_mode<synchronous>, transform_indices = @transform_2, window_bounds = array<i64: 400, 512>}, {pipeline_mode = #tpu.pipeline_mode<synchronous>, transform_indices = @transform_3, window_bounds = array<i64: 512, 256>}, {pipeline_mode = #tpu.pipeline_mode<synchronous>, transform_indices = @transform_4, window_bounds = array<i64: 1, 256>}, {pipeline_mode = #tpu.pipeline_mode<synchronous>, transform_indices = @transform_5, window_bounds = array<i64: 256, 128>}, {pipeline_mode = #tpu.pipeline_mode<synchronous>, transform_indices = @transform_6, window_bounds = array<i64: 1, 128>}, {pipeline_mode = #tpu.pipeline_mode<synchronous>, transform_indices = @transform_7, window_bounds = array<i64: 1, 128>}, {transform_indices = @transform_8, window_bounds = array<i64: 1>}, {transform_indices = @transform_9, window_bounds = array<i64: 1, 1, 8>}]} {
    %c0 = arith.constant 0 : index
    %c0_0 = arith.constant 0 : index
    %0 = vector.load %arg1[%c0, %c0_0] : memref<8x400xbf16, #tpu.memory_space<vmem>>, vector<8x400xbf16>
    %c0_1 = arith.constant 0 : index
    %c0_2 = arith.constant 0 : index
    %1 = vector.load %arg3[%c0_1, %c0_2] : memref<400x512xbf16, #tpu.memory_space<vmem>>, vector<400x512xbf16>
    %cst = arith.constant dense<0.000000e+00> : vector<8x512xf32>
    %2 = tpu.matmul %0, %1, %cst {dimension_numbers = #tpu.dot_dimension_numbers<[1], [0], [0], [1], [0, 0, 1, 1], [], []>} : vector<8x400xbf16>, vector<400x512xbf16>, vector<8x512xf32> -> vector<8x512xf32>
    %c0_3 = arith.constant 0 : index
    %c0_4 = arith.constant 0 : index
    %3 = vector.load %arg2[%c0_3, %c0_4] : memref<8x512xf32, #tpu.memory_space<vmem>>, vector<8x512xf32>
    %4 = arith.addf %2, %3 : vector<8x512xf32>
    %cst_5 = arith.constant 0.000000e+00 : f32
    %5 = vector.broadcast %cst_5 : f32 to vector<8x512xf32>
    %6 = arith.cmpf oge, %4, %5 : vector<8x512xf32>
    %cst_6 = arith.constant 2.000000e-01 : f32
    %7 = vector.broadcast %cst_6 : f32 to vector<8x512xf32>
    %8 = arith.mulf %7, %4 : vector<8x512xf32>
    %9 = arith.select %6, %4, %8 : vector<8x512xi1>, vector<8x512xf32>
    %10 = arith.truncf %9 : vector<8x512xf32> to vector<8x512xbf16>
    %c0_7 = arith.constant 0 : index
    %c0_8 = arith.constant 0 : index
    %11 = vector.load %arg4[%c0_7, %c0_8] : memref<512x256xbf16, #tpu.memory_space<vmem>>, vector<512x256xbf16>
    %cst_9 = arith.constant dense<0.000000e+00> : vector<8x256xf32>
    %12 = tpu.matmul %10, %11, %cst_9 {dimension_numbers = #tpu.dot_dimension_numbers<[1], [0], [0], [1], [0, 0, 1, 1], [], []>} : vector<8x512xbf16>, vector<512x256xbf16>, vector<8x256xf32> -> vector<8x256xf32>
    %c0_10 = arith.constant 0 : index
    %c0_11 = arith.constant 0 : index
    %13 = vector.load %arg5[%c0_10, %c0_11] : memref<1x256xf32, #tpu.memory_space<vmem>>, vector<1x256xf32>
    %14 = vector.broadcast %13 : vector<1x256xf32> to vector<8x256xf32>
    %15 = arith.addf %12, %14 : vector<8x256xf32>
    %cst_12 = arith.constant 0.000000e+00 : f32
    %16 = vector.broadcast %cst_12 : f32 to vector<8x256xf32>
    %17 = arith.cmpf oge, %15, %16 : vector<8x256xf32>
    %cst_13 = arith.constant 2.000000e-01 : f32
    %18 = vector.broadcast %cst_13 : f32 to vector<8x256xf32>
    %19 = arith.mulf %18, %15 : vector<8x256xf32>
    %20 = arith.select %17, %15, %19 : vector<8x256xi1>, vector<8x256xf32>
    %21 = arith.truncf %20 : vector<8x256xf32> to vector<8x256xbf16>
    %c0_14 = arith.constant 0 : index
    %c0_15 = arith.constant 0 : index
    %22 = vector.load %arg6[%c0_14, %c0_15] : memref<256x128xbf16, #tpu.memory_space<vmem>>, vector<256x128xbf16>
    %cst_16 = arith.constant dense<0.000000e+00> : vector<8x128xf32>
    %23 = tpu.matmul %21, %22, %cst_16 {dimension_numbers = #tpu.dot_dimension_numbers<[1], [0], [0], [1], [0, 0, 1, 1], [], []>} : vector<8x256xbf16>, vector<256x128xbf16>, vector<8x128xf32> -> vector<8x128xf32>
    %c0_17 = arith.constant 0 : index
    %c0_18 = arith.constant 0 : index
    %24 = vector.load %arg7[%c0_17, %c0_18] : memref<1x128xf32, #tpu.memory_space<vmem>>, vector<1x128xf32>
    %25 = vector.broadcast %24 : vector<1x128xf32> to vector<8x128xf32>
    %26 = arith.addf %23, %25 : vector<8x128xf32>
    %cst_19 = arith.constant 0.000000e+00 : f32
    %27 = vector.broadcast %cst_19 : f32 to vector<8x128xf32>
    %28 = arith.cmpf oge, %26, %27 : vector<8x128xf32>
    %cst_20 = arith.constant 2.000000e-01 : f32
    %29 = vector.broadcast %cst_20 : f32 to vector<8x128xf32>
    %30 = arith.mulf %29, %26 : vector<8x128xf32>
    %31 = arith.select %28, %26, %30 : vector<8x128xi1>, vector<8x128xf32>
    %c0_21 = arith.constant 0 : index
    %c0_22 = arith.constant 0 : index
    %32 = vector.load %arg8[%c0_21, %c0_22] : memref<1x128xbf16, #tpu.memory_space<vmem>>, vector<1x128xbf16>
    %33 = arith.truncf %31 : vector<8x128xf32> to vector<8x128xbf16>
    %cst_23 = arith.constant dense<0.000000e+00> : vector<1x8xf32>
    %34 = tpu.matmul %32, %33, %cst_23 {dimension_numbers = #tpu.dot_dimension_numbers<[1], [1], [0], [0], [0, 0, 1, 0], [], []>} : vector<1x128xbf16>, vector<8x128xbf16>, vector<1x8xf32> -> vector<1x8xf32>
    %c0_24 = arith.constant 0 : index
    %35 = memref.load %arg9[%c0_24] : memref<1xf32, #tpu.memory_space<smem>>
    %36 = vector.broadcast %35 : f32 to vector<1x8xf32>
    %37 = arith.addf %34, %36 : vector<1x8xf32>
    %38 = arith.negf %37 : vector<1x8xf32>
    %39 = math.exp %38 : vector<1x8xf32>
    %cst_25 = arith.constant 1.000000e+00 : f32
    %40 = vector.broadcast %cst_25 : f32 to vector<1x8xf32>
    %41 = arith.addf %40, %39 : vector<1x8xf32>
    %42 = arith.divf %40, %41 : vector<1x8xf32>
    %c0_26 = arith.constant 0 : index
    %c0_27 = arith.constant 0 : index
    %c0_28 = arith.constant 0 : index
    %43 = vector.load %arg10[%c0_26, %c0_27, %c0_28] : memref<1x1x8xf32, #tpu.memory_space<vmem>>, vector<1x1x8xf32>
    %44 = vector.shape_cast %43 : vector<1x1x8xf32> to vector<1x8xf32>
    %45 = vector.shape_cast %42 : vector<1x8xf32> to vector<1x1x8xf32>
    tpu.vector_store %arg10[%c0_26, %c0_27, %c0_28], %45 {strides = array<i32>} : memref<1x1x8xf32, #tpu.memory_space<vmem>>, vector<1x1x8xf32>,
    return
  }
  func.func @transform_0(%arg0: i32) -> (i32, i32) {
    %c0_i32 = arith.constant 0 : i32
    %c0_i32_0 = arith.constant 0 : i32
    return %arg0, %c0_i32 : i32, i32
  }
  func.func @transform_1(%arg0: i32) -> (i32, i32) {
    %c0_i32 = arith.constant 0 : i32
    %c0_i32_0 = arith.constant 0 : i32
    return %arg0, %c0_i32 : i32, i32
  }
  func.func @transform_2(%arg0: i32) -> (i32, i32) {
    %c0_i32 = arith.constant 0 : i32
    %c0_i32_0 = arith.constant 0 : i32
    %c0_i32_1 = arith.constant 0 : i32
    return %c0_i32, %c0_i32_0 : i32, i32
  }
  func.func @transform_3(%arg0: i32) -> (i32, i32) {
    %c0_i32 = arith.constant 0 : i32
    %c0_i32_0 = arith.constant 0 : i32
    %c0_i32_1 = arith.constant 0 : i32
    return %c0_i32, %c0_i32_0 : i32, i32
  }
  func.func @transform_4(%arg0: i32) -> (i32, i32) {
    %c0_i32 = arith.constant 0 : i32
    %c0_i32_0 = arith.constant 0 : i32
    %c0_i32_1 = arith.constant 0 : i32
    return %c0_i32, %c0_i32_0 : i32, i32
  }
  func.func @transform_5(%arg0: i32) -> (i32, i32) {
    %c0_i32 = arith.constant 0 : i32
    %c0_i32_0 = arith.constant 0 : i32
    %c0_i32_1 = arith.constant 0 : i32
    return %c0_i32, %c0_i32_0 : i32, i32
  }
  func.func @transform_6(%arg0: i32) -> (i32, i32) {
    %c0_i32 = arith.constant 0 : i32
    %c0_i32_0 = arith.constant 0 : i32
    %c0_i32_1 = arith.constant 0 : i32
    return %c0_i32, %c0_i32_0 : i32, i32
  }
  func.func @transform_7(%arg0: i32) -> (i32, i32) {
    %c0_i32 = arith.constant 0 : i32
    %c0_i32_0 = arith.constant 0 : i32
    %c0_i32_1 = arith.constant 0 : i32
    return %c0_i32, %c0_i32_0 : i32, i32
  }
  func.func @transform_8(%arg0: i32) -> i32 {
    %c0_i32 = arith.constant 0 : i32
    %c0_i32_0 = arith.constant 0 : i32
    return %c0_i32 : i32
  }
  func.func @transform_9(%arg0: i32) -> (i32, i32, i32) {
    %c0_i32 = arith.constant 0 : i32
    %c0_i32_0 = arith.constant 0 : i32
    %c0_i32_1 = arith.constant 0 : i32
    return %arg0, %c0_i32, %c0_i32_0 : i32, i32, i32
  }
}

</mosaic_0001>

<llo_original>
// kernel: tpu_custom_call.1
$region0: #{tpu_custom_call.1}
  #allocation0 [shape = 'u32[]', space=smem, size = 0x4, offset = 0x4, fixed_abs, tag = 'smem constant byte address 0x4 - core index']
  #allocation1 [shape = 'u32[144,128]{1,0:T(1,128)}', space=vmem, size = 0x12000, scoped, tag = 'internal scratch']
  #allocation2 [shape = 'f32[1]{0:T(128)S(6)}', space=smem, size = 0x200, scoped, tag = 'scoped memory for tpu_custom_call.1']
  %s0 = inlined_call_operand.hbm [shape: bf16[8,400], index: 0, kind: input, shape index: {}]
  %s1 = inlined_call_operand.hbm [shape: f32[8,512], index: 1, kind: input, shape index: {}]
  %s2 = inlined_call_operand.hbm [shape: bf16[400,512], index: 2, kind: input, shape index: {}]
  %s3 = inlined_call_operand.hbm [shape: bf16[512,256], index: 3, kind: input, shape index: {}]
  %s4 = inlined_call_operand.vmem [shape: f32[1,256], index: 4, kind: input, shape index: {}]
  %s5 = inlined_call_operand.hbm [shape: bf16[256,128], index: 5, kind: input, shape index: {}]
  %s6 = inlined_call_operand.vmem [shape: f32[1,128], index: 6, kind: input, shape index: {}]
  %s7 = inlined_call_operand.vmem [shape: bf16[1,128], index: 7, kind: input, shape index: {}]
  %s8 = inlined_call_operand.<no memory space> [shape: f32[1], index: 8, kind: input, shape index: {}]
  %s9 = inlined_call_operand.hbm [shape: f32[1,1,8], index: 9, kind: output, shape index: {}]
  %s10 = sld [smem:[#allocation0]]
  $region66: #{tpu_custom_call.1} parent=0
    _
  %s12 = ssub.s32 1, %s10
  %s13 = scalar_select 0, %s12, %s10
  %14 = sst [smem:[#allocation2]] %s8
  $region1: #{tpu_custom_call.1} parent=0
    #allocation3 [shape = 'u8[8192]{0}', space=vmem, size = 0x2000, scoped, tag = 'input window, operand 0, single buffered']
    #allocation4 [shape = 's32[1]{0}', space=sflag, size = 0x4, scoped, tag = 'scoped memory for tpu_custom_call.1']
    #allocation5 [shape = 's32[1]{0}', space=sflag, size = 0x4, scoped, tag = 'scoped memory for tpu_custom_call.1']
    #allocation6 [shape = 'u8[16384]{0}', space=vmem, size = 0x4000, scoped, tag = 'input window, operand 1, single buffered']
    #allocation7 [shape = 's32[1]{0}', space=sflag, size = 0x4, scoped, tag = 'scoped memory for tpu_custom_call.1']
    #allocation8 [shape = 'u8[409600]{0}', space=vmem, size = 0x64000, scoped, tag = 'input window, operand 2, single buffered']
    #allocation9 [shape = 'u8[262144]{0}', space=vmem, size = 0x40000, scoped, tag = 'input window, operand 3, single buffered']
    #allocation10 [shape = 's32[1]{0}', space=sflag, size = 0x4, scoped, tag = 'scoped memory for tpu_custom_call.1']
    #allocation11 [shape = 'u8[65536]{0}', space=vmem, size = 0x10000, scoped, tag = 'input window, operand 5, single buffered']
    #allocation12 [shape = 'u8[512]{0}', space=vmem, size = 0x400, scoped, tag = 'output window, operand 0, single buffered']
    %15 = vsyncpa [#allocation4], 0
    %16 = vsyncpa [#allocation7], 0
    %17 = vsyncpa [#allocation10], 0
    %18 = vsyncpa [#allocation5], 0
    // Predicated region
    $region2: #{tpu_custom_call.1} parent=1 // pred_check
      _
    $region3: #{tpu_custom_call.1} parent=1 // pred_check_branch
      %20 = sbr.rel (0) target = $region5
    $region4: #{tpu_custom_call.1} parent=1 // pred_region
      %s22 = ssub.s32 256, 256
      %23 = vsyncadd [#allocation4], %s22
      %s25 = sshll.u32 [#allocation3], 4
      %s26 = int_to_ptr.vmem [resolvable:$true] %s25
      %28 = dma.hbm_to_vmem [thread:$0]  %s0, 256, %s26, [#allocation4]
    $region5: #{tpu_custom_call.1} parent=1 // pred_fallthru
      _
    // Predicated region
    $region6: #{tpu_custom_call.1} parent=1 // pred_check
      _
    $region7: #{tpu_custom_call.1} parent=1 // pred_check_branch
      %30 = sbr.rel (0) target = $region9
    $region8: #{tpu_custom_call.1} parent=1 // pred_region
      %s32 = ssub.s32 512, 512
      %33 = vsyncadd [#allocation7], %s32
      %s35 = sshll.u32 [#allocation6], 4
      %s36 = int_to_ptr.vmem [resolvable:$true] %s35
      %38 = dma.hbm_to_vmem [thread:$0]  %s1, 512, %s36, [#allocation7]
    $region9: #{tpu_custom_call.1} parent=1 // pred_fallthru
      _
    // Predicated region
    $region10: #{tpu_custom_call.1} parent=1 // pred_check
      _
    $region11: #{tpu_custom_call.1} parent=1 // pred_check_branch
      %40 = sbr.rel (0) target = $region13
    $region12: #{tpu_custom_call.1} parent=1 // pred_region
      %s42 = ssub.s32 12800, 12800
      %43 = vsyncadd [#allocation7], %s42
      %s44 = sshll.u32 [#allocation8], 4
      %s45 = int_to_ptr.vmem [resolvable:$true] %s44
      %50 = dma.hbm_to_vmem [thread:$0]  %s2, 12800, %s45, [#allocation7], 256, 256, 16
    $region13: #{tpu_custom_call.1} parent=1 // pred_fallthru
      _
    // Predicated region
    $region14: #{tpu_custom_call.1} parent=1 // pred_check
      _
    $region15: #{tpu_custom_call.1} parent=1 // pred_check_branch
      %52 = sbr.rel (0) target = $region17
    $region16: #{tpu_custom_call.1} parent=1 // pred_region
      %s54 = ssub.s32 8192, 8192
      %55 = vsyncadd [#allocation10], %s54
      %s56 = sshll.u32 [#allocation9], 4
      %s57 = int_to_ptr.vmem [resolvable:$true] %s56
      %62 = dma.hbm_to_vmem [thread:$0]  %s3, 8192, %s57, [#allocation10], 128, 128, 8
    $region17: #{tpu_custom_call.1} parent=1 // pred_fallthru
      _
    // Predicated region
    $region18: #{tpu_custom_call.1} parent=1 // pred_check
      _
    $region19: #{tpu_custom_call.1} parent=1 // pred_check_branch
      %64 = sbr.rel (0) target = $region21
    $region20: #{tpu_custom_call.1} parent=1 // pred_region
      _
    $region21: #{tpu_custom_call.1} parent=1 // pred_fallthru
      _
    // Predicated region
    $region22: #{tpu_custom_call.1} parent=1 // pred_check
      _
    $region23: #{tpu_custom_call.1} parent=1 // pred_check_branch
      %66 = sbr.rel (0) target = $region25
    $region24: #{tpu_custom_call.1} parent=1 // pred_region
      %s68 = ssub.s32 2048, 2048
      %69 = vsyncadd [#allocation10], %s68
      %s70 = sshll.u32 [#allocation11], 4
      %s71 = int_to_ptr.vmem [resolvable:$true] %s70
      %76 = dma.hbm_to_vmem [thread:$0]  %s5, 2048, %s71, [#allocation10], 64, 64, 4
    $region25: #{tpu_custom_call.1} parent=1 // pred_fallthru
      _
    // Predicated region
    $region26: #{tpu_custom_call.1} parent=1 // pred_check
      _
    $region27: #{tpu_custom_call.1} parent=1 // pred_check_branch
      %78 = sbr.rel (0) target = $region29
    $region28: #{tpu_custom_call.1} parent=1 // pred_region
      _
    $region29: #{tpu_custom_call.1} parent=1 // pred_fallthru
      _
    // Predicated region
    $region30: #{tpu_custom_call.1} parent=1 // pred_check
      _
    $region31: #{tpu_custom_call.1} parent=1 // pred_check_branch
      %80 = sbr.rel (0) target = $region33
    $region32: #{tpu_custom_call.1} parent=1 // pred_region
      _
    $region33: #{tpu_custom_call.1} parent=1 // pred_fallthru
      _
    // Predicated region
    $region34: #{tpu_custom_call.1} parent=1 // pred_check
      _
    $region35: #{tpu_custom_call.1} parent=1 // pred_check_branch
      %82 = sbr.rel (0) target = $region37
    $region36: #{tpu_custom_call.1} parent=1 // pred_region
      _
    $region37: #{tpu_custom_call.1} parent=1 // pred_fallthru
      _
    // Predicated region
    $region38: #{tpu_custom_call.1} parent=1 // pred_check
      _
    $region39: #{tpu_custom_call.1} parent=1 // pred_check_branch
      %84 = sbr.rel (0) target = $region41
    $region40: #{tpu_custom_call.1} parent=1 // pred_region
      %85 = dma.done [#allocation4], 256
    $region41: #{tpu_custom_call.1} parent=1 // pred_fallthru
      _
    // Predicated region
    $region42: #{tpu_custom_call.1} parent=1 // pred_check
      _
    $region43: #{tpu_custom_call.1} parent=1 // pred_check_branch
      %87 = sbr.rel (0) target = $region45
    $region44: #{tpu_custom_call.1} parent=1 // pred_region
      %88 = dma.done [#allocation7], 512
    $region45: #{tpu_custom_call.1} parent=1 // pred_fallthru
      _
    // Predicated region
    $region46: #{tpu_custom_call.1} parent=1 // pred_check
      _
    $region47: #{tpu_custom_call.1} parent=1 // pred_check_branch
      %90 = sbr.rel (0) target = $region49
    $region48: #{tpu_custom_call.1} parent=1 // pred_region
      %91 = dma.done [#allocation7], 12800
    $region49: #{tpu_custom_call.1} parent=1 // pred_fallthru
      _
    // Predicated region
    $region50: #{tpu_custom_call.1} parent=1 // pred_check
      _
    $region51: #{tpu_custom_call.1} parent=1 // pred_check_branch
      %93 = sbr.rel (0) target = $region53
    $region52: #{tpu_custom_call.1} parent=1 // pred_region
      %94 = dma.done [#allocation10], 8192
    $region53: #{tpu_custom_call.1} parent=1 // pred_fallthru
      _
    // Predicated region
    $region54: #{tpu_custom_call.1} parent=1 // pred_check
      _
    $region55: #{tpu_custom_call.1} parent=1 // pred_check_branch
      %96 = sbr.rel (0) target = $region57
    $region56: #{tpu_custom_call.1} parent=1 // pred_region
      %97 = dma.done [#allocation10], 2048
    $region57: #{tpu_custom_call.1} parent=1 // pred_fallthru
      _
    %v99 = vld [vmem:[#allocation3] sm:$0xff]
    %v100 = vld [vmem:[#allocation3 + $0x8] sm:$0xff]
    %v101 = vld [vmem:[#allocation8] sm:$0xff]
    %v102 = vld [vmem:[#allocation8 + $0x8] sm:$0xff]
    %v103 = vld [vmem:[#allocation8 + $0x10] sm:$0xff]
    %v104 = vld [vmem:[#allocation8 + $0x18] sm:$0xff]
    %v105 = vld [vmem:[#allocation8 + $0x20] sm:$0xff]
    %v106 = vld [vmem:[#allocation8 + $0x28] sm:$0xff]
    %v107 = vld [vmem:[#allocation8 + $0x30] sm:$0xff]
    %v108 = vld [vmem:[#allocation8 + $0x38] sm:$0xff]
    %v109 = vld [vmem:[#allocation8 + $0x40] sm:$0xff]
    %v110 = vld [vmem:[#allocation8 + $0x48] sm:$0xff]
    %v111 = vld [vmem:[#allocation8 + $0x50] sm:$0xff]
    %v112 = vld [vmem:[#allocation8 + $0x58] sm:$0xff]
    %v113 = vld [vmem:[#allocation8 + $0x60] sm:$0xff]
    %v114 = vld [vmem:[#allocation8 + $0x68] sm:$0xff]
    %v115 = vld [vmem:[#allocation8 + $0x70] sm:$0xff]
    %v116 = vld [vmem:[#allocation8 + $0x78] sm:$0xff]
    %v117 = vld [vmem:[#allocation8 + $0x80] sm:$0xff]
    %v118 = vld [vmem:[#allocation8 + $0x88] sm:$0xff]
    %v119 = vld [vmem:[#allocation8 + $0x90] sm:$0xff]
    %v120 = vld [vmem:[#allocation8 + $0x98] sm:$0xff]
    %v121 = vld [vmem:[#allocation8 + $0xa0] sm:$0xff]
    %v122 = vld [vmem:[#allocation8 + $0xa8] sm:$0xff]
    %v123 = vld [vmem:[#allocation8 + $0xb0] sm:$0xff]
    %v124 = vld [vmem:[#allocation8 + $0xb8] sm:$0xff]
    %v125 = vld [vmem:[#allocation8 + $0xc0] sm:$0xff]
    %v126 = vld [vmem:[#allocation8 + $0xc8] sm:$0xff]
    %v127 = vld [vmem:[#allocation8 + $0xd0] sm:$0xff]
    %v128 = vld [vmem:[#allocation8 + $0xd8] sm:$0xff]
    %v129 = vld [vmem:[#allocation8 + $0xe0] sm:$0xff]
    %v130 = vld [vmem:[#allocation8 + $0xe8] sm:$0xff]
    %v131 = vld [vmem:[#allocation8 + $0xf0] sm:$0xff]
    %v132 = vld [vmem:[#allocation8 + $0xf8] sm:$0xff]
    %v133 = vld [vmem:[#allocation8 + $0x100] sm:$0xff]
    %v134 = vld [vmem:[#allocation8 + $0x108] sm:$0xff]
    %v135 = vld [vmem:[#allocation8 + $0x110] sm:$0xff]
    %v136 = vld [vmem:[#allocation8 + $0x118] sm:$0xff]
    %v137 = vld [vmem:[#allocation8 + $0x120] sm:$0xff]
    %v138 = vld [vmem:[#allocation8 + $0x128] sm:$0xff]
    %v139 = vld [vmem:[#allocation8 + $0x130] sm:$0xff]
    %v140 = vld [vmem:[#allocation8 + $0x138] sm:$0xff]
    %v141 = vld [vmem:[#allocation8 + $0x140] sm:$0xff]
    %v142 = vld [vmem:[#allocation8 + $0x148] sm:$0xff]
    %v143 = vld [vmem:[#allocation8 + $0x150] sm:$0xff]
    %v144 = vld [vmem:[#allocation8 + $0x158] sm:$0xff]
    %v145 = vld [vmem:[#allocation8 + $0x160] sm:$0xff]
    %v146 = vld [vmem:[#allocation8 + $0x168] sm:$0xff]
    %v147 = vld [vmem:[#allocation8 + $0x170] sm:$0xff]
    %v148 = vld [vmem:[#allocation8 + $0x178] sm:$0xff]
    %v149 = vld [vmem:[#allocation8 + $0x180] sm:$0xff]
    %v150 = vld [vmem:[#allocation8 + $0x188] sm:$0xff]
    %v151 = vld [vmem:[#allocation8 + $0x190] sm:$0xff]
    %v152 = vld [vmem:[#allocation8 + $0x198] sm:$0xff]
    %v153 = vld [vmem:[#allocation8 + $0x1a0] sm:$0xff]
    %v154 = vld [vmem:[#allocation8 + $0x1a8] sm:$0xff]
    %v155 = vld [vmem:[#allocation8 + $0x1b0] sm:$0xff]
    %v156 = vld [vmem:[#allocation8 + $0x1b8] sm:$0xff]
    %v157 = vld [vmem:[#allocation8 + $0x1c0] sm:$0xff]
    %v158 = vld [vmem:[#allocation8 + $0x1c8] sm:$0xff]
    %v159 = vld [vmem:[#allocation8 + $0x1d0] sm:$0xff]
    %v160 = vld [vmem:[#allocation8 + $0x1d8] sm:$0xff]
    %v161 = vld [vmem:[#allocation8 + $0x1e0] sm:$0xff]
    %v162 = vld [vmem:[#allocation8 + $0x1e8] sm:$0xff]
    %v163 = vld [vmem:[#allocation8 + $0x1f0] sm:$0xff]
    %v164 = vld [vmem:[#allocation8 + $0x1f8] sm:$0xff]
    %v165 = vld [vmem:[#allocation8 + $0x200] sm:$0xff]
    %v166 = vld [vmem:[#allocation8 + $0x208] sm:$0xff]
    %v167 = vld [vmem:[#allocation8 + $0x210] sm:$0xff]
    %v168 = vld [vmem:[#allocation8 + $0x218] sm:$0xff]
    %v169 = vld [vmem:[#allocation8 + $0x220] sm:$0xff]
    %v170 = vld [vmem:[#allocation8 + $0x228] sm:$0xff]
    %v171 = vld [vmem:[#allocation8 + $0x230] sm:$0xff]
    %v172 = vld [vmem:[#allocation8 + $0x238] sm:$0xff]
    %v173 = vld [vmem:[#allocation8 + $0x240] sm:$0xff]
    %v174 = vld [vmem:[#allocation8 + $0x248] sm:$0xff]
    %v175 = vld [vmem:[#allocation8 + $0x250] sm:$0xff]
    %v176 = vld [vmem:[#allocation8 + $0x258] sm:$0xff]
    %v177 = vld [vmem:[#allocation8 + $0x260] sm:$0xff]
    %v178 = vld [vmem:[#allocation8 + $0x268] sm:$0xff]
    %v179 = vld [vmem:[#allocation8 + $0x270] sm:$0xff]
    %v180 = vld [vmem:[#allocation8 + $0x278] sm:$0xff]
    %v181 = vld [vmem:[#allocation8 + $0x280] sm:$0xff]
    %v182 = vld [vmem:[#allocation8 + $0x288] sm:$0xff]
    %v183 = vld [vmem:[#allocation8 + $0x290] sm:$0xff]
    %v184 = vld [vmem:[#allocation8 + $0x298] sm:$0xff]
    %v185 = vld [vmem:[#allocation8 + $0x2a0] sm:$0xff]
    %v186 = vld [vmem:[#allocation8 + $0x2a8] sm:$0xff]
    %v187 = vld [vmem:[#allocation8 + $0x2b0] sm:$0xff]
    %v188 = vld [vmem:[#allocation8 + $0x2b8] sm:$0xff]
    %v189 = vld [vmem:[#allocation8 + $0x2c0] sm:$0xff]
    %v190 = vld [vmem:[#allocation8 + $0x2c8] sm:$0xff]
    %v191 = vld [vmem:[#allocation8 + $0x2d0] sm:$0xff]
    %v192 = vld [vmem:[#allocation8 + $0x2d8] sm:$0xff]
    %v193 = vld [vmem:[#allocation8 + $0x2e0] sm:$0xff]
    %v194 = vld [vmem:[#allocation8 + $0x2e8] sm:$0xff]
    %v195 = vld [vmem:[#allocation8 + $0x2f0] sm:$0xff]
    %v196 = vld [vmem:[#allocation8 + $0x2f8] sm:$0xff]
    %v197 = vld [vmem:[#allocation8 + $0x300] sm:$0xff]
    %v198 = vld [vmem:[#allocation8 + $0x308] sm:$0xff]
    %v199 = vld [vmem:[#allocation8 + $0x310] sm:$0xff]
    %v200 = vld [vmem:[#allocation8 + $0x318] sm:$0xff]
    %v201 = vld [vmem:[#allocation6] sm:$0xff]
    %v202 = vld [vmem:[#allocation6 + $0x8] sm:$0xff]
    %v203 = vld [vmem:[#allocation6 + $0x10] sm:$0xff]
    %v204 = vld [vmem:[#allocation6 + $0x18] sm:$0xff]
    %v207 = vunpack.c.l.b16 %v99
    %v208 = vunpack.c.h.b16 %v99
    %v209 = vunpack.c.l.b16 %v100
    %v210 = vunpack.c.h.b16 %v100
    %v211 = vpack.c.b16 %v207, %v207
    %v212 = vpack.c.b16 %v208, %v208
    %v213 = vpack.c.b16 %v209, %v209
    %v214 = vpack.c.b16 %v210, %v210
    %v318 = vunpack.c.l.b16 %v101
    %v319 = vunpack.c.h.b16 %v101
    %v320 = vunpack.c.l.b16 %v102
    %v321 = vunpack.c.h.b16 %v102
    %v322 = vunpack.c.l.b16 %v103
    %v323 = vunpack.c.h.b16 %v103
    %v324 = vunpack.c.l.b16 %v104
    %v325 = vunpack.c.h.b16 %v104
    %v326 = vunpack.c.l.b16 %v105
    %v327 = vunpack.c.h.b16 %v105
    %v328 = vunpack.c.l.b16 %v106
    %v329 = vunpack.c.h.b16 %v106
    %v330 = vunpack.c.l.b16 %v107
    %v331 = vunpack.c.h.b16 %v107
    %v332 = vunpack.c.l.b16 %v108
    %v333 = vunpack.c.h.b16 %v108
    %v334 = vunpack.c.l.b16 %v109
    %v335 = vunpack.c.h.b16 %v109
    %v336 = vunpack.c.l.b16 %v110
    %v337 = vunpack.c.h.b16 %v110
    %v338 = vunpack.c.l.b16 %v111
    %v339 = vunpack.c.h.b16 %v111
    %v340 = vunpack.c.l.b16 %v112
    %v341 = vunpack.c.h.b16 %v112
    %v342 = vunpack.c.l.b16 %v113
    %v343 = vunpack.c.h.b16 %v113
    %v344 = vunpack.c.l.b16 %v114
    %v345 = vunpack.c.h.b16 %v114
    %v346 = vunpack.c.l.b16 %v115
    %v347 = vunpack.c.h.b16 %v115
    %v348 = vunpack.c.l.b16 %v116
    %v349 = vunpack.c.h.b16 %v116
    %v350 = vunpack.c.l.b16 %v117
    %v351 = vunpack.c.h.b16 %v117
    %v352 = vunpack.c.l.b16 %v118
    %v353 = vunpack.c.h.b16 %v118
    %v354 = vunpack.c.l.b16 %v119
    %v355 = vunpack.c.h.b16 %v119
    %v356 = vunpack.c.l.b16 %v120
    %v357 = vunpack.c.h.b16 %v120
    %v358 = vunpack.c.l.b16 %v121
    %v359 = vunpack.c.h.b16 %v121
    %v360 = vunpack.c.l.b16 %v122
    %v361 = vunpack.c.h.b16 %v122
    %v362 = vunpack.c.l.b16 %v123
    %v363 = vunpack.c.h.b16 %v123
    %v364 = vunpack.c.l.b16 %v124
    %v365 = vunpack.c.h.b16 %v124
    %v366 = vunpack.c.l.b16 %v125
    %v367 = vunpack.c.h.b16 %v125
    %v368 = vunpack.c.l.b16 %v126
    %v369 = vunpack.c.h.b16 %v126
    %v370 = vunpack.c.l.b16 %v127
    %v371 = vunpack.c.h.b16 %v127
    %v372 = vunpack.c.l.b16 %v128
    %v373 = vunpack.c.h.b16 %v128
    %v374 = vunpack.c.l.b16 %v129
    %v375 = vunpack.c.h.b16 %v129
    %v376 = vunpack.c.l.b16 %v130
    %v377 = vunpack.c.h.b16 %v130
    %v378 = vunpack.c.l.b16 %v131
    %v379 = vunpack.c.h.b16 %v131
    %v380 = vunpack.c.l.b16 %v132
    %v381 = vunpack.c.h.b16 %v132
    %v382 = vunpack.c.l.b16 %v133
    %v383 = vunpack.c.h.b16 %v133
    %v384 = vunpack.c.l.b16 %v134
    %v385 = vunpack.c.h.b16 %v134
    %v386 = vunpack.c.l.b16 %v135
    %v387 = vunpack.c.h.b16 %v135
    %v388 = vunpack.c.l.b16 %v136
    %v389 = vunpack.c.h.b16 %v136
    %v390 = vunpack.c.l.b16 %v137
    %v391 = vunpack.c.h.b16 %v137
    %v392 = vunpack.c.l.b16 %v138
    %v393 = vunpack.c.h.b16 %v138
    %v394 = vunpack.c.l.b16 %v139
    %v395 = vunpack.c.h.b16 %v139
    %v396 = vunpack.c.l.b16 %v140
    %v397 = vunpack.c.h.b16 %v140
    %v398 = vunpack.c.l.b16 %v141
    %v399 = vunpack.c.h.b16 %v141
    %v400 = vunpack.c.l.b16 %v142
    %v401 = vunpack.c.h.b16 %v142
    %v402 = vunpack.c.l.b16 %v143
    %v403 = vunpack.c.h.b16 %v143
    %v404 = vunpack.c.l.b16 %v144
    %v405 = vunpack.c.h.b16 %v144
    %v406 = vunpack.c.l.b16 %v145
    %v407 = vunpack.c.h.b16 %v145
    %v408 = vunpack.c.l.b16 %v146
    %v409 = vunpack.c.h.b16 %v146
    %v410 = vunpack.c.l.b16 %v147
    %v411 = vunpack.c.h.b16 %v147
    %v412 = vunpack.c.l.b16 %v148
    %v413 = vunpack.c.h.b16 %v148
    %v414 = vunpack.c.l.b16 %v149
    %v415 = vunpack.c.h.b16 %v149
    %v416 = vunpack.c.l.b16 %v150
    %v417 = vunpack.c.h.b16 %v150
    %v418 = vunpack.c.l.b16 %v151
    %v419 = vunpack.c.h.b16 %v151
    %v420 = vunpack.c.l.b16 %v152
    %v421 = vunpack.c.h.b16 %v152
    %v422 = vunpack.c.l.b16 %v153
    %v423 = vunpack.c.h.b16 %v153
    %v424 = vunpack.c.l.b16 %v154
    %v425 = vunpack.c.h.b16 %v154
    %v426 = vunpack.c.l.b16 %v155
    %v427 = vunpack.c.h.b16 %v155
    %v428 = vunpack.c.l.b16 %v156
    %v429 = vunpack.c.h.b16 %v156
    %v430 = vunpack.c.l.b16 %v157
    %v431 = vunpack.c.h.b16 %v157
    %v432 = vunpack.c.l.b16 %v158
    %v433 = vunpack.c.h.b16 %v158
    %v434 = vunpack.c.l.b16 %v159
    %v435 = vunpack.c.h.b16 %v159
    %v436 = vunpack.c.l.b16 %v160
    %v437 = vunpack.c.h.b16 %v160
    %v438 = vunpack.c.l.b16 %v161
    %v439 = vunpack.c.h.b16 %v161
    %v440 = vunpack.c.l.b16 %v162
    %v441 = vunpack.c.h.b16 %v162
    %v442 = vunpack.c.l.b16 %v163
    %v443 = vunpack.c.h.b16 %v163
    %v444 = vunpack.c.l.b16 %v164
    %v445 = vunpack.c.h.b16 %v164
    %v446 = vunpack.c.l.b16 %v165
    %v447 = vunpack.c.h.b16 %v165
    %v448 = vunpack.c.l.b16 %v166
    %v449 = vunpack.c.h.b16 %v166
    %v450 = vunpack.c.l.b16 %v167
    %v451 = vunpack.c.h.b16 %v167
    %v452 = vunpack.c.l.b16 %v168
    %v453 = vunpack.c.h.b16 %v168
    %v454 = vunpack.c.l.b16 %v169
    %v455 = vunpack.c.h.b16 %v169
    %v456 = vunpack.c.l.b16 %v170
    %v457 = vunpack.c.h.b16 %v170
    %v458 = vunpack.c.l.b16 %v171
    %v459 = vunpack.c.h.b16 %v171
    %v460 = vunpack.c.l.b16 %v172
    %v461 = vunpack.c.h.b16 %v172
    %v462 = vunpack.c.l.b16 %v173
    %v463 = vunpack.c.h.b16 %v173
    %v464 = vunpack.c.l.b16 %v174
    %v465 = vunpack.c.h.b16 %v174
    %v466 = vunpack.c.l.b16 %v175
    %v467 = vunpack.c.h.b16 %v175
    %v468 = vunpack.c.l.b16 %v176
    %v469 = vunpack.c.h.b16 %v176
    %v470 = vunpack.c.l.b16 %v177
    %v471 = vunpack.c.h.b16 %v177
    %v472 = vunpack.c.l.b16 %v178
    %v473 = vunpack.c.h.b16 %v178
    %v474 = vunpack.c.l.b16 %v179
    %v475 = vunpack.c.h.b16 %v179
    %v476 = vunpack.c.l.b16 %v180
    %v477 = vunpack.c.h.b16 %v180
    %v478 = vunpack.c.l.b16 %v181
    %v479 = vunpack.c.h.b16 %v181
    %v480 = vunpack.c.l.b16 %v182
    %v481 = vunpack.c.h.b16 %v182
    %v482 = vunpack.c.l.b16 %v183
    %v483 = vunpack.c.h.b16 %v183
    %v484 = vunpack.c.l.b16 %v184
    %v485 = vunpack.c.h.b16 %v184
    %v486 = vunpack.c.l.b16 %v185
    %v487 = vunpack.c.h.b16 %v185
    %v488 = vunpack.c.l.b16 %v186
    %v489 = vunpack.c.h.b16 %v186
    %v490 = vunpack.c.l.b16 %v187
    %v491 = vunpack.c.h.b16 %v187
    %v492 = vunpack.c.l.b16 %v188
    %v493 = vunpack.c.h.b16 %v188
    %v494 = vunpack.c.l.b16 %v189
    %v495 = vunpack.c.h.b16 %v189
    %v496 = vunpack.c.l.b16 %v190
    %v497 = vunpack.c.h.b16 %v190
    %v498 = vunpack.c.l.b16 %v191
    %v499 = vunpack.c.h.b16 %v191
    %v500 = vunpack.c.l.b16 %v192
    %v501 = vunpack.c.h.b16 %v192
    %v502 = vunpack.c.l.b16 %v193
    %v503 = vunpack.c.h.b16 %v193
    %v504 = vunpack.c.l.b16 %v194
    %v505 = vunpack.c.h.b16 %v194
    %v506 = vunpack.c.l.b16 %v195
    %v507 = vunpack.c.h.b16 %v195
    %v508 = vunpack.c.l.b16 %v196
    %v509 = vunpack.c.h.b16 %v196
    %v510 = vunpack.c.l.b16 %v197
    %v511 = vunpack.c.h.b16 %v197
    %v512 = vunpack.c.l.b16 %v198
    %v513 = vunpack.c.h.b16 %v198
    %v514 = vunpack.c.l.b16 %v199
    %v515 = vunpack.c.h.b16 %v199
    %v516 = vunpack.c.l.b16 %v200
    %v517 = vunpack.c.h.b16 %v200
    %v518 = vpack.c.b16 %v322, %v318
    %v519 = vpack.c.b16 %v323, %v319
    %v520 = vpack.c.b16 %v324, %v320
    %v521 = vpack.c.b16 %v325, %v321
    %v522 = vpack.c.b16 %v330, %v326
    %v523 = vpack.c.b16 %v331, %v327
    %v524 = vpack.c.b16 %v332, %v328
    %v525 = vpack.c.b16 %v333, %v329
    %v526 = vpack.c.b16 %v338, %v334
    %v527 = vpack.c.b16 %v339, %v335
    %v528 = vpack.c.b16 %v340, %v336
    %v529 = vpack.c.b16 %v341, %v337
    %v530 = vpack.c.b16 %v346, %v342
    %v531 = vpack.c.b16 %v347, %v343
    %v532 = vpack.c.b16 %v348, %v344
    %v533 = vpack.c.b16 %v349, %v345
    %v534 = vpack.c.b16 %v354, %v350
    %v535 = vpack.c.b16 %v355, %v351
    %v536 = vpack.c.b16 %v356, %v352
    %v537 = vpack.c.b16 %v357, %v353
    %v538 = vpack.c.b16 %v362, %v358
    %v539 = vpack.c.b16 %v363, %v359
    %v540 = vpack.c.b16 %v364, %v360
    %v541 = vpack.c.b16 %v365, %v361
    %v542 = vpack.c.b16 %v370, %v366
    %v543 = vpack.c.b16 %v371, %v367
    %v544 = vpack.c.b16 %v372, %v368
    %v545 = vpack.c.b16 %v373, %v369
    %v546 = vpack.c.b16 %v378, %v374
    %v547 = vpack.c.b16 %v379, %v375
    %v548 = vpack.c.b16 %v380, %v376
    %v549 = vpack.c.b16 %v381, %v377
    %v550 = vpack.c.b16 %v386, %v382
    %v551 = vpack.c.b16 %v387, %v383
    %v552 = vpack.c.b16 %v388, %v384
    %v553 = vpack.c.b16 %v389, %v385
    %v554 = vpack.c.b16 %v394, %v390
    %v555 = vpack.c.b16 %v395, %v391
    %v556 = vpack.c.b16 %v396, %v392
    %v557 = vpack.c.b16 %v397, %v393
    %v558 = vpack.c.b16 %v402, %v398
    %v559 = vpack.c.b16 %v403, %v399
    %v560 = vpack.c.b16 %v404, %v400
    %v561 = vpack.c.b16 %v405, %v401
    %v562 = vpack.c.b16 %v410, %v406
    %v563 = vpack.c.b16 %v411, %v407
    %v564 = vpack.c.b16 %v412, %v408
    %v565 = vpack.c.b16 %v413, %v409
    %v566 = vpack.c.b16 %v418, %v414
    %v567 = vpack.c.b16 %v419, %v415
    %v568 = vpack.c.b16 %v420, %v416
    %v569 = vpack.c.b16 %v421, %v417
    %v570 = vpack.c.b16 %v426, %v422
    %v571 = vpack.c.b16 %v427, %v423
    %v572 = vpack.c.b16 %v428, %v424
    %v573 = vpack.c.b16 %v429, %v425
    %v574 = vpack.c.b16 %v434, %v430
    %v575 = vpack.c.b16 %v435, %v431
    %v576 = vpack.c.b16 %v436, %v432
    %v577 = vpack.c.b16 %v437, %v433
    %v578 = vpack.c.b16 %v442, %v438
    %v579 = vpack.c.b16 %v443, %v439
    %v580 = vpack.c.b16 %v444, %v440
    %v581 = vpack.c.b16 %v445, %v441
    %v582 = vpack.c.b16 %v450, %v446
    %v583 = vpack.c.b16 %v451, %v447
    %v584 = vpack.c.b16 %v452, %v448
    %v585 = vpack.c.b16 %v453, %v449
    %v586 = vpack.c.b16 %v458, %v454
    %v587 = vpack.c.b16 %v459, %v455
    %v588 = vpack.c.b16 %v460, %v456
    %v589 = vpack.c.b16 %v461, %v457
    %v590 = vpack.c.b16 %v466, %v462
    %v591 = vpack.c.b16 %v467, %v463
    %v592 = vpack.c.b16 %v468, %v464
    %v593 = vpack.c.b16 %v469, %v465
    %v594 = vpack.c.b16 %v474, %v470
    %v595 = vpack.c.b16 %v475, %v471
    %v596 = vpack.c.b16 %v476, %v472
    %v597 = vpack.c.b16 %v477, %v473
    %v598 = vpack.c.b16 %v482, %v478
    %v599 = vpack.c.b16 %v483, %v479
    %v600 = vpack.c.b16 %v484, %v480
    %v601 = vpack.c.b16 %v485, %v481
    %v602 = vpack.c.b16 %v490, %v486
    %v603 = vpack.c.b16 %v491, %v487
    %v604 = vpack.c.b16 %v492, %v488
    %v605 = vpack.c.b16 %v493, %v489
    %v606 = vpack.c.b16 %v498, %v494
    %v607 = vpack.c.b16 %v499, %v495
    %v608 = vpack.c.b16 %v500, %v496
    %v609 = vpack.c.b16 %v501, %v497
    %v610 = vpack.c.b16 %v506, %v502
    %v611 = vpack.c.b16 %v507, %v503
    %v612 = vpack.c.b16 %v508, %v504
    %v613 = vpack.c.b16 %v509, %v505
    %v614 = vpack.c.b16 %v514, %v510
    %v615 = vpack.c.b16 %v515, %v511
    %v616 = vpack.c.b16 %v516, %v512
    %v617 = vpack.c.b16 %v517, %v513
    %vm718 = vcmask 130048
    %v720 = vsel %vm718, %v214, 0
    %722 = vmatprep.subr.bf16.mxu0 %v519
    %723 = vmatpush1.bf16.msra.mxu0 %v518
    %724 = vmatprep.subr.bf16.mxu0 %v523
    %725 = vmatpush1.bf16.msra.mxu0 %v522
    %726 = vmatprep.subr.bf16.mxu0 %v527
    %727 = vmatpush1.bf16.msra.mxu0 %v526
    %728 = vmatprep.subr.bf16.mxu0 %v531
    %729 = vmatpush1.bf16.msra.mxu0 %v530
    %730 = vmatprep.subr.bf16.mxu0 %v535
    %731 = vmatpush1.bf16.msra.mxu0 %v534
    %732 = vmatprep.subr.bf16.mxu0 %v539
    %733 = vmatpush1.bf16.msra.mxu0 %v538
    %734 = vmatprep.subr.bf16.mxu0 %v543
    %735 = vmatpush1.bf16.msra.mxu0 %v542
    %736 = vmatprep.subr.bf16.mxu0 %v547
    %737 = vmatpush1.bf16.msra.mxu0 %v546
    %738 = vmatprep.subr.bf16.mxu0 %v551
    %739 = vmatpush1.bf16.msra.mxu0 %v550
    %740 = vmatprep.subr.bf16.mxu0 %v555
    %741 = vmatpush1.bf16.msra.mxu0 %v554
    %742 = vmatprep.subr.bf16.mxu0 %v559
    %743 = vmatpush1.bf16.msra.mxu0 %v558
    %744 = vmatprep.subr.bf16.mxu0 %v563
    %745 = vmatpush1.bf16.msra.mxu0 %v562
    %746 = vmatprep.subr.bf16.mxu0 %v567
    %747 = vmatpush1.bf16.msra.mxu0 %v566
    %748 = vmatprep.subr.bf16.mxu0 %v571
    %749 = vmatpush1.bf16.msra.mxu0 %v570
    %750 = vmatprep.subr.bf16.mxu0 %v575
    %751 = vmatpush1.bf16.msra.mxu0 %v574
    %752 = vmatprep.subr.bf16.mxu0 %v579
    %753 = vmatpush1.bf16.msra.mxu0 %v578
    %754 = vmatprep.mubr.bf16.mxu0 %v212
    %755 = vmatmul.mubr.bf16.gmra.mrb[0].mxu0 %v211
    %v756 = vpop.f32.mrb[0].mxu0
    %v757 = vadd.f32 %v201, %v756
    %v758 = vpop.f32.mrb[0].mxu0
    %v759 = vadd.f32 %v202, %v758
    %v760 = vpop.f32.mrb[0].mxu0
    %v761 = vpop.f32.mrb[0].mxu0
    %762 = vdwg.mxu0
    %763 = vmatprep.subr.bf16.mxu0 %v583
    %764 = vmatpush1.bf16.msra.mxu0 %v582
    %765 = vmatprep.subr.bf16.mxu0 %v587
    %766 = vmatpush1.bf16.msra.mxu0 %v586
    %767 = vmatprep.subr.bf16.mxu0 %v591
    %768 = vmatpush1.bf16.msra.mxu0 %v590
    %769 = vmatprep.subr.bf16.mxu0 %v595
    %770 = vmatpush1.bf16.msra.mxu0 %v594
    %771 = vmatprep.subr.bf16.mxu0 %v599
    %772 = vmatpush1.bf16.msra.mxu0 %v598
    %773 = vmatprep.subr.bf16.mxu0 %v603
    %774 = vmatpush1.bf16.msra.mxu0 %v602
    %775 = vmatprep.subr.bf16.mxu0 %v607
    %776 = vmatpush1.bf16.msra.mxu0 %v606
    %777 = vmatprep.subr.bf16.mxu0 %v611
    %778 = vmatpush1.bf16.msra.mxu0 %v610
    %779 = vmatprep.subr.bf16.mxu0 %v615
    %780 = vmatpush1.bf16.msra.mxu0 %v614
    %781 = vmatprep.subr.bf16.mxu0 0
    %782 = vmatpush1.bf16.msra.mxu0 0
    %783 = vmatprep.subr.bf16.mxu0 0
    %784 = vmatpush1.bf16.msra.mxu0 0
    %785 = vmatprep.subr.bf16.mxu0 0
    %786 = vmatpush1.bf16.msra.mxu0 0
    %787 = vmatprep.subr.bf16.mxu0 0
    %788 = vmatpush1.bf16.msra.mxu0 0
    %789 = vmatprep.subr.bf16.mxu0 0
    %790 = vmatpush1.bf16.msra.mxu0 0
    %791 = vmatprep.subr.bf16.mxu0 0
    %792 = vmatpush1.bf16.msra.mxu0 0
    %793 = vmatprep.subr.bf16.mxu0 0
    %794 = vmatpush1.bf16.msra.mxu0 0
    %795 = vmatprep.mubr.bf16.mxu0 %v720
    %796 = vmatmul.mubr.bf16.gmra.mrb[0].mxu0 %v213
    %v797 = vpop.f32.mrb[0].mxu0
    %v798 = vadd.f32 %v757, %v797
    %v799 = vpop.f32.mrb[0].mxu0
    %v800 = vadd.f32 %v759, %v799
    %v801 = vpop.f32.mrb[0].mxu0
    %v802 = vpop.f32.mrb[0].mxu0
    %803 = vdwg.mxu0
    %804 = vmatprep.subr.bf16.mxu0 %v521
    %805 = vmatpush1.bf16.msra.mxu0 %v520
    %806 = vmatprep.subr.bf16.mxu0 %v525
    %807 = vmatpush1.bf16.msra.mxu0 %v524
    %808 = vmatprep.subr.bf16.mxu0 %v529
    %809 = vmatpush1.bf16.msra.mxu0 %v528
    %810 = vmatprep.subr.bf16.mxu0 %v533
    %811 = vmatpush1.bf16.msra.mxu0 %v532
    %812 = vmatprep.subr.bf16.mxu0 %v537
    %813 = vmatpush1.bf16.msra.mxu0 %v536
    %814 = vmatprep.subr.bf16.mxu0 %v541
    %815 = vmatpush1.bf16.msra.mxu0 %v540
    %816 = vmatprep.subr.bf16.mxu0 %v545
    %817 = vmatpush1.bf16.msra.mxu0 %v544
    %818 = vmatprep.subr.bf16.mxu0 %v549
    %819 = vmatpush1.bf16.msra.mxu0 %v548
    %820 = vmatprep.subr.bf16.mxu0 %v553
    %821 = vmatpush1.bf16.msra.mxu0 %v552
    %822 = vmatprep.subr.bf16.mxu0 %v557
    %823 = vmatpush1.bf16.msra.mxu0 %v556
    %824 = vmatprep.subr.bf16.mxu0 %v561
    %825 = vmatpush1.bf16.msra.mxu0 %v560
    %826 = vmatprep.subr.bf16.mxu0 %v565
    %827 = vmatpush1.bf16.msra.mxu0 %v564
    %828 = vmatprep.subr.bf16.mxu0 %v569
    %829 = vmatpush1.bf16.msra.mxu0 %v568
    %830 = vmatprep.subr.bf16.mxu0 %v573
    %831 = vmatpush1.bf16.msra.mxu0 %v572
    %832 = vmatprep.subr.bf16.mxu0 %v577
    %833 = vmatpush1.bf16.msra.mxu0 %v576
    %834 = vmatprep.subr.bf16.mxu0 %v581
    %835 = vmatpush1.bf16.msra.mxu0 %v580
    %836 = vmatprep.mubr.bf16.mxu0 %v212
    %837 = vmatmul.mubr.bf16.gmra.mrb[0].mxu0 %v211
    %v838 = vpop.f32.mrb[0].mxu0
    %v839 = vadd.f32 %v203, %v838
    %v840 = vpop.f32.mrb[0].mxu0
    %v841 = vadd.f32 %v204, %v840
    %v842 = vpop.f32.mrb[0].mxu0
    %v843 = vpop.f32.mrb[0].mxu0
    %844 = vdwg.mxu0
    %845 = vmatprep.subr.bf16.mxu0 %v585
    %846 = vmatpush1.bf16.msra.mxu0 %v584
    %847 = vmatprep.subr.bf16.mxu0 %v589
    %848 = vmatpush1.bf16.msra.mxu0 %v588
    %849 = vmatprep.subr.bf16.mxu0 %v593
    %850 = vmatpush1.bf16.msra.mxu0 %v592
    %851 = vmatprep.subr.bf16.mxu0 %v597
    %852 = vmatpush1.bf16.msra.mxu0 %v596
    %853 = vmatprep.subr.bf16.mxu0 %v601
    %854 = vmatpush1.bf16.msra.mxu0 %v600
    %855 = vmatprep.subr.bf16.mxu0 %v605
    %856 = vmatpush1.bf16.msra.mxu0 %v604
    %857 = vmatprep.subr.bf16.mxu0 %v609
    %858 = vmatpush1.bf16.msra.mxu0 %v608
    %859 = vmatprep.subr.bf16.mxu0 %v613
    %860 = vmatpush1.bf16.msra.mxu0 %v612
    %861 = vmatprep.subr.bf16.mxu0 %v617
    %862 = vmatpush1.bf16.msra.mxu0 %v616
    %863 = vmatprep.subr.bf16.mxu0 0
    %864 = vmatpush1.bf16.msra.mxu0 0
    %865 = vmatprep.subr.bf16.mxu0 0
    %866 = vmatpush1.bf16.msra.mxu0 0
    %867 = vmatprep.subr.bf16.mxu0 0
    %868 = vmatpush1.bf16.msra.mxu0 0
    %869 = vmatprep.subr.bf16.mxu0 0
    %870 = vmatpush1.bf16.msra.mxu0 0
    %871 = vmatprep.subr.bf16.mxu0 0
    %872 = vmatpush1.bf16.msra.mxu0 0
    %873 = vmatprep.subr.bf16.mxu0 0
    %874 = vmatpush1.bf16.msra.mxu0 0
    %875 = vmatprep.subr.bf16.mxu0 0
    %876 = vmatpush1.bf16.msra.mxu0 0
    %877 = vmatprep.mubr.bf16.mxu0 %v720
    %878 = vmatmul.mubr.bf16.gmra.mrb[0].mxu0 %v213
    %v879 = vpop.f32.mrb[0].mxu0
    %v880 = vadd.f32 %v839, %v879
    %v881 = vpop.f32.mrb[0].mxu0
    %v882 = vadd.f32 %v841, %v881
    %v883 = vpop.f32.mrb[0].mxu0
    %v884 = vpop.f32.mrb[0].mxu0
    %885 = vdwg.mxu0
    %vm886 = vcmp.ge.f32.partialorder %v798, 0.0
    %vm887 = vcmp.ge.f32.partialorder %v800, 0.0
    %vm888 = vcmp.ge.f32.partialorder %v880, 0.0
    %vm889 = vcmp.ge.f32.partialorder %v882, 0.0
    %v890 = vmul.f32 %v798, 0.2
    %v891 = vmul.f32 %v800, 0.2
    %v892 = vmul.f32 %v880, 0.2
    %v893 = vmul.f32 %v882, 0.2
    %v894 = vsel %vm886, %v798, %v890
    %v895 = vsel %vm887, %v800, %v891
    %v896 = vsel %vm888, %v880, %v892
    %v897 = vsel %vm889, %v882, %v893
    %v898 = vpack.c.bf16 %v894, %v894
    %v899 = vpack.c.bf16 %v895, %v895
    %v900 = vpack.c.bf16 %v896, %v896
    %v901 = vpack.c.bf16 %v897, %v897
    %v902 = vld [vmem:[#allocation9] sm:$0xff]
    %v903 = vld [vmem:[#allocation9 + $0x8] sm:$0xff]
    %v904 = vld [vmem:[#allocation9 + $0x10] sm:$0xff]
    %v905 = vld [vmem:[#allocation9 + $0x18] sm:$0xff]
    %v906 = vld [vmem:[#allocation9 + $0x20] sm:$0xff]
    %v907 = vld [vmem:[#allocation9 + $0x28] sm:$0xff]
    %v908 = vld [vmem:[#allocation9 + $0x30] sm:$0xff]
    %v909 = vld [vmem:[#allocation9 + $0x38] sm:$0xff]
    %v910 = vld [vmem:[#allocation9 + $0x40] sm:$0xff]
    %v911 = vld [vmem:[#allocation9 + $0x48] sm:$0xff]
    %v912 = vld [vmem:[#allocation9 + $0x50] sm:$0xff]
    %v913 = vld [vmem:[#allocation9 + $0x58] sm:$0xff]
    %v914 = vld [vmem:[#allocation9 + $0x60] sm:$0xff]
    %v915 = vld [vmem:[#allocation9 + $0x68] sm:$0xff]
    %v916 = vld [vmem:[#allocation9 + $0x70] sm:$0xff]
    %v917 = vld [vmem:[#allocation9 + $0x78] sm:$0xff]
    %v918 = vld [vmem:[#allocation9 + $0x80] sm:$0xff]
    %v919 = vld [vmem:[#allocation9 + $0x88] sm:$0xff]
    %v920 = vld [vmem:[#allocation9 + $0x90] sm:$0xff]
    %v921 = vld [vmem:[#allocation9 + $0x98] sm:$0xff]
    %v922 = vld [vmem:[#allocation9 + $0xa0] sm:$0xff]
    %v923 = vld [vmem:[#allocation9 + $0xa8] sm:$0xff]
    %v924 = vld [vmem:[#allocation9 + $0xb0] sm:$0xff]
    %v925 = vld [vmem:[#allocation9 + $0xb8] sm:$0xff]
    %v926 = vld [vmem:[#allocation9 + $0xc0] sm:$0xff]
    %v927 = vld [vmem:[#allocation9 + $0xc8] sm:$0xff]
    %v928 = vld [vmem:[#allocation9 + $0xd0] sm:$0xff]
    %v929 = vld [vmem:[#allocation9 + $0xd8] sm:$0xff]
    %v930 = vld [vmem:[#allocation9 + $0xe0] sm:$0xff]
    %v931 = vld [vmem:[#allocation9 + $0xe8] sm:$0xff]
    %v932 = vld [vmem:[#allocation9 + $0xf0] sm:$0xff]
    %v933 = vld [vmem:[#allocation9 + $0xf8] sm:$0xff]
    %v934 = vld [vmem:[#allocation9 + $0x100] sm:$0xff]
    %v935 = vld [vmem:[#allocation9 + $0x108] sm:$0xff]
    %v936 = vld [vmem:[#allocation9 + $0x110] sm:$0xff]
    %v937 = vld [vmem:[#allocation9 + $0x118] sm:$0xff]
    %v938 = vld [vmem:[#allocation9 + $0x120] sm:$0xff]
    %v939 = vld [vmem:[#allocation9 + $0x128] sm:$0xff]
    %v940 = vld [vmem:[#allocation9 + $0x130] sm:$0xff]
    %v941 = vld [vmem:[#allocation9 + $0x138] sm:$0xff]
    %v942 = vld [vmem:[#allocation9 + $0x140] sm:$0xff]
    %v943 = vld [vmem:[#allocation9 + $0x148] sm:$0xff]
    %v944 = vld [vmem:[#allocation9 + $0x150] sm:$0xff]
    %v945 = vld [vmem:[#allocation9 + $0x158] sm:$0xff]
    %v946 = vld [vmem:[#allocation9 + $0x160] sm:$0xff]
    %v947 = vld [vmem:[#allocation9 + $0x168] sm:$0xff]
    %v948 = vld [vmem:[#allocation9 + $0x170] sm:$0xff]
    %v949 = vld [vmem:[#allocation9 + $0x178] sm:$0xff]
    %v950 = vld [vmem:[#allocation9 + $0x180] sm:$0xff]
    %v951 = vld [vmem:[#allocation9 + $0x188] sm:$0xff]
    %v952 = vld [vmem:[#allocation9 + $0x190] sm:$0xff]
    %v953 = vld [vmem:[#allocation9 + $0x198] sm:$0xff]
    %v954 = vld [vmem:[#allocation9 + $0x1a0] sm:$0xff]
    %v955 = vld [vmem:[#allocation9 + $0x1a8] sm:$0xff]
    %v956 = vld [vmem:[#allocation9 + $0x1b0] sm:$0xff]
    %v957 = vld [vmem:[#allocation9 + $0x1b8] sm:$0xff]
    %v958 = vld [vmem:[#allocation9 + $0x1c0] sm:$0xff]
    %v959 = vld [vmem:[#allocation9 + $0x1c8] sm:$0xff]
    %v960 = vld [vmem:[#allocation9 + $0x1d0] sm:$0xff]
    %v961 = vld [vmem:[#allocation9 + $0x1d8] sm:$0xff]
    %v962 = vld [vmem:[#allocation9 + $0x1e0] sm:$0xff]
    %v963 = vld [vmem:[#allocation9 + $0x1e8] sm:$0xff]
    %v964 = vld [vmem:[#allocation9 + $0x1f0] sm:$0xff]
    %v965 = vld [vmem:[#allocation9 + $0x1f8] sm:$0xff]
    %v966 = vld [vmem:[%s4] sm:$0x3]
    %v968 = vlaneseq
    %v969 = vshrl.u32 %v968, 7
    %v970 = vsub.s32 0, %v969
    %v971 = vrot.slane %v966, %v970
    %v972 = vlaneseq
    %v973 = vshrl.u32 %v972, 7
    %v974 = vsub.s32 1, %v973
    %v975 = vrot.slane %v966, %v974
    %v1042 = vunpack.c.l.b16 %v902
    %v1043 = vunpack.c.h.b16 %v902
    %v1044 = vunpack.c.l.b16 %v903
    %v1045 = vunpack.c.h.b16 %v903
    %v1046 = vunpack.c.l.b16 %v904
    %v1047 = vunpack.c.h.b16 %v904
    %v1048 = vunpack.c.l.b16 %v905
    %v1049 = vunpack.c.h.b16 %v905
    %v1050 = vunpack.c.l.b16 %v906
    %v1051 = vunpack.c.h.b16 %v906
    %v1052 = vunpack.c.l.b16 %v907
    %v1053 = vunpack.c.h.b16 %v907
    %v1054 = vunpack.c.l.b16 %v908
    %v1055 = vunpack.c.h.b16 %v908
    %v1056 = vunpack.c.l.b16 %v909
    %v1057 = vunpack.c.h.b16 %v909
    %v1058 = vunpack.c.l.b16 %v910
    %v1059 = vunpack.c.h.b16 %v910
    %v1060 = vunpack.c.l.b16 %v911
    %v1061 = vunpack.c.h.b16 %v911
    %v1062 = vunpack.c.l.b16 %v912
    %v1063 = vunpack.c.h.b16 %v912
    %v1064 = vunpack.c.l.b16 %v913
    %v1065 = vunpack.c.h.b16 %v913
    %v1066 = vunpack.c.l.b16 %v914
    %v1067 = vunpack.c.h.b16 %v914
    %v1068 = vunpack.c.l.b16 %v915
    %v1069 = vunpack.c.h.b16 %v915
    %v1070 = vunpack.c.l.b16 %v916
    %v1071 = vunpack.c.h.b16 %v916
    %v1072 = vunpack.c.l.b16 %v917
    %v1073 = vunpack.c.h.b16 %v917
    %v1074 = vunpack.c.l.b16 %v918
    %v1075 = vunpack.c.h.b16 %v918
    %v1076 = vunpack.c.l.b16 %v919
    %v1077 = vunpack.c.h.b16 %v919
    %v1078 = vunpack.c.l.b16 %v920
    %v1079 = vunpack.c.h.b16 %v920
    %v1080 = vunpack.c.l.b16 %v921
    %v1081 = vunpack.c.h.b16 %v921
    %v1082 = vunpack.c.l.b16 %v922
    %v1083 = vunpack.c.h.b16 %v922
    %v1084 = vunpack.c.l.b16 %v923
    %v1085 = vunpack.c.h.b16 %v923
    %v1086 = vunpack.c.l.b16 %v924
    %v1087 = vunpack.c.h.b16 %v924
    %v1088 = vunpack.c.l.b16 %v925
    %v1089 = vunpack.c.h.b16 %v925
    %v1090 = vunpack.c.l.b16 %v926
    %v1091 = vunpack.c.h.b16 %v926
    %v1092 = vunpack.c.l.b16 %v927
    %v1093 = vunpack.c.h.b16 %v927
    %v1094 = vunpack.c.l.b16 %v928
    %v1095 = vunpack.c.h.b16 %v928
    %v1096 = vunpack.c.l.b16 %v929
    %v1097 = vunpack.c.h.b16 %v929
    %v1098 = vunpack.c.l.b16 %v930
    %v1099 = vunpack.c.h.b16 %v930
    %v1100 = vunpack.c.l.b16 %v931
    %v1101 = vunpack.c.h.b16 %v931
    %v1102 = vunpack.c.l.b16 %v932
    %v1103 = vunpack.c.h.b16 %v932
    %v1104 = vunpack.c.l.b16 %v933
    %v1105 = vunpack.c.h.b16 %v933
    %v1106 = vunpack.c.l.b16 %v934
    %v1107 = vunpack.c.h.b16 %v934
    %v1108 = vunpack.c.l.b16 %v935
    %v1109 = vunpack.c.h.b16 %v935
    %v1110 = vunpack.c.l.b16 %v936
    %v1111 = vunpack.c.h.b16 %v936
    %v1112 = vunpack.c.l.b16 %v937
    %v1113 = vunpack.c.h.b16 %v937
    %v1114 = vunpack.c.l.b16 %v938
    %v1115 = vunpack.c.h.b16 %v938
    %v1116 = vunpack.c.l.b16 %v939
    %v1117 = vunpack.c.h.b16 %v939
    %v1118 = vunpack.c.l.b16 %v940
    %v1119 = vunpack.c.h.b16 %v940
    %v1120 = vunpack.c.l.b16 %v941
    %v1121 = vunpack.c.h.b16 %v941
    %v1122 = vunpack.c.l.b16 %v942
    %v1123 = vunpack.c.h.b16 %v942
    %v1124 = vunpack.c.l.b16 %v943
    %v1125 = vunpack.c.h.b16 %v943
    %v1126 = vunpack.c.l.b16 %v944
    %v1127 = vunpack.c.h.b16 %v944
    %v1128 = vunpack.c.l.b16 %v945
    %v1129 = vunpack.c.h.b16 %v945
    %v1130 = vunpack.c.l.b16 %v946
    %v1131 = vunpack.c.h.b16 %v946
    %v1132 = vunpack.c.l.b16 %v947
    %v1133 = vunpack.c.h.b16 %v947
    %v1134 = vunpack.c.l.b16 %v948
    %v1135 = vunpack.c.h.b16 %v948
    %v1136 = vunpack.c.l.b16 %v949
    %v1137 = vunpack.c.h.b16 %v949
    %v1138 = vunpack.c.l.b16 %v950
    %v1139 = vunpack.c.h.b16 %v950
    %v1140 = vunpack.c.l.b16 %v951
    %v1141 = vunpack.c.h.b16 %v951
    %v1142 = vunpack.c.l.b16 %v952
    %v1143 = vunpack.c.h.b16 %v952
    %v1144 = vunpack.c.l.b16 %v953
    %v1145 = vunpack.c.h.b16 %v953
    %v1146 = vunpack.c.l.b16 %v954
    %v1147 = vunpack.c.h.b16 %v954
    %v1148 = vunpack.c.l.b16 %v955
    %v1149 = vunpack.c.h.b16 %v955
    %v1150 = vunpack.c.l.b16 %v956
    %v1151 = vunpack.c.h.b16 %v956
    %v1152 = vunpack.c.l.b16 %v957
    %v1153 = vunpack.c.h.b16 %v957
    %v1154 = vunpack.c.l.b16 %v958
    %v1155 = vunpack.c.h.b16 %v958
    %v1156 = vunpack.c.l.b16 %v959
    %v1157 = vunpack.c.h.b16 %v959
    %v1158 = vunpack.c.l.b16 %v960
    %v1159 = vunpack.c.h.b16 %v960
    %v1160 = vunpack.c.l.b16 %v961
    %v1161 = vunpack.c.h.b16 %v961
    %v1162 = vunpack.c.l.b16 %v962
    %v1163 = vunpack.c.h.b16 %v962
    %v1164 = vunpack.c.l.b16 %v963
    %v1165 = vunpack.c.h.b16 %v963
    %v1166 = vunpack.c.l.b16 %v964
    %v1167 = vunpack.c.h.b16 %v964
    %v1168 = vunpack.c.l.b16 %v965
    %v1169 = vunpack.c.h.b16 %v965
    %v1170 = vpack.c.b16 %v1044, %v1042
    %v1171 = vpack.c.b16 %v1045, %v1043
    %v1172 = vpack.c.b16 %v1048, %v1046
    %v1173 = vpack.c.b16 %v1049, %v1047
    %v1174 = vpack.c.b16 %v1052, %v1050
    %v1175 = vpack.c.b16 %v1053, %v1051
    %v1176 = vpack.c.b16 %v1056, %v1054
    %v1177 = vpack.c.b16 %v1057, %v1055
    %v1178 = vpack.c.b16 %v1060, %v1058
    %v1179 = vpack.c.b16 %v1061, %v1059
    %v1180 = vpack.c.b16 %v1064, %v1062
    %v1181 = vpack.c.b16 %v1065, %v1063
    %v1182 = vpack.c.b16 %v1068, %v1066
    %v1183 = vpack.c.b16 %v1069, %v1067
    %v1184 = vpack.c.b16 %v1072, %v1070
    %v1185 = vpack.c.b16 %v1073, %v1071
    %v1186 = vpack.c.b16 %v1076, %v1074
    %v1187 = vpack.c.b16 %v1077, %v1075
    %v1188 = vpack.c.b16 %v1080, %v1078
    %v1189 = vpack.c.b16 %v1081, %v1079
    %v1190 = vpack.c.b16 %v1084, %v1082
    %v1191 = vpack.c.b16 %v1085, %v1083
    %v1192 = vpack.c.b16 %v1088, %v1086
    %v1193 = vpack.c.b16 %v1089, %v1087
    %v1194 = vpack.c.b16 %v1092, %v1090
    %v1195 = vpack.c.b16 %v1093, %v1091
    %v1196 = vpack.c.b16 %v1096, %v1094
    %v1197 = vpack.c.b16 %v1097, %v1095
    %v1198 = vpack.c.b16 %v1100, %v1098
    %v1199 = vpack.c.b16 %v1101, %v1099
    %v1200 = vpack.c.b16 %v1104, %v1102
    %v1201 = vpack.c.b16 %v1105, %v1103
    %v1202 = vpack.c.b16 %v1108, %v1106
    %v1203 = vpack.c.b16 %v1109, %v1107
    %v1204 = vpack.c.b16 %v1112, %v1110
    %v1205 = vpack.c.b16 %v1113, %v1111
    %v1206 = vpack.c.b16 %v1116, %v1114
    %v1207 = vpack.c.b16 %v1117, %v1115
    %v1208 = vpack.c.b16 %v1120, %v1118
    %v1209 = vpack.c.b16 %v1121, %v1119
    %v1210 = vpack.c.b16 %v1124, %v1122
    %v1211 = vpack.c.b16 %v1125, %v1123
    %v1212 = vpack.c.b16 %v1128, %v1126
    %v1213 = vpack.c.b16 %v1129, %v1127
    %v1214 = vpack.c.b16 %v1132, %v1130
    %v1215 = vpack.c.b16 %v1133, %v1131
    %v1216 = vpack.c.b16 %v1136, %v1134
    %v1217 = vpack.c.b16 %v1137, %v1135
    %v1218 = vpack.c.b16 %v1140, %v1138
    %v1219 = vpack.c.b16 %v1141, %v1139
    %v1220 = vpack.c.b16 %v1144, %v1142
    %v1221 = vpack.c.b16 %v1145, %v1143
    %v1222 = vpack.c.b16 %v1148, %v1146
    %v1223 = vpack.c.b16 %v1149, %v1147
    %v1224 = vpack.c.b16 %v1152, %v1150
    %v1225 = vpack.c.b16 %v1153, %v1151
    %v1226 = vpack.c.b16 %v1156, %v1154
    %v1227 = vpack.c.b16 %v1157, %v1155
    %v1228 = vpack.c.b16 %v1160, %v1158
    %v1229 = vpack.c.b16 %v1161, %v1159
    %v1230 = vpack.c.b16 %v1164, %v1162
    %v1231 = vpack.c.b16 %v1165, %v1163
    %v1232 = vpack.c.b16 %v1168, %v1166
    %v1233 = vpack.c.b16 %v1169, %v1167
    %1298 = vmatprep.subr.bf16.mxu0 %v1171
    %1299 = vmatpush1.bf16.msra.mxu0 %v1170
    %1300 = vmatprep.subr.bf16.mxu0 %v1173
    %1301 = vmatpush1.bf16.msra.mxu0 %v1172
    %1302 = vmatprep.subr.bf16.mxu0 %v1175
    %1303 = vmatpush1.bf16.msra.mxu0 %v1174
    %1304 = vmatprep.subr.bf16.mxu0 %v1177
    %1305 = vmatpush1.bf16.msra.mxu0 %v1176
    %1306 = vmatprep.subr.bf16.mxu0 %v1179
    %1307 = vmatpush1.bf16.msra.mxu0 %v1178
    %1308 = vmatprep.subr.bf16.mxu0 %v1181
    %1309 = vmatpush1.bf16.msra.mxu0 %v1180
    %1310 = vmatprep.subr.bf16.mxu0 %v1183
    %1311 = vmatpush1.bf16.msra.mxu0 %v1182
    %1312 = vmatprep.subr.bf16.mxu0 %v1185
    %1313 = vmatpush1.bf16.msra.mxu0 %v1184
    %1314 = vmatprep.subr.bf16.mxu0 %v1187
    %1315 = vmatpush1.bf16.msra.mxu0 %v1186
    %1316 = vmatprep.subr.bf16.mxu0 %v1189
    %1317 = vmatpush1.bf16.msra.mxu0 %v1188
    %1318 = vmatprep.subr.bf16.mxu0 %v1191
    %1319 = vmatpush1.bf16.msra.mxu0 %v1190
    %1320 = vmatprep.subr.bf16.mxu0 %v1193
    %1321 = vmatpush1.bf16.msra.mxu0 %v1192
    %1322 = vmatprep.subr.bf16.mxu0 %v1195
    %1323 = vmatpush1.bf16.msra.mxu0 %v1194
    %1324 = vmatprep.subr.bf16.mxu0 %v1197
    %1325 = vmatpush1.bf16.msra.mxu0 %v1196
    %1326 = vmatprep.subr.bf16.mxu0 %v1199
    %1327 = vmatpush1.bf16.msra.mxu0 %v1198
    %1328 = vmatprep.subr.bf16.mxu0 %v1201
    %1329 = vmatpush1.bf16.msra.mxu0 %v1200
    %1330 = vmatprep.mubr.bf16.mxu0 %v899
    %1331 = vmatmul.mubr.bf16.gmra.mrb[0].mxu0 %v898
    %v1332 = vpop.f32.mrb[0].mxu0
    %v1333 = vadd.f32 %v971, %v1332
    %v1334 = vpop.f32.mrb[0].mxu0
    %v1335 = vadd.f32 %v975, %v1334
    %v1336 = vpop.f32.mrb[0].mxu0
    %v1337 = vpop.f32.mrb[0].mxu0
    %1338 = vdwg.mxu0
    %1339 = vmatprep.subr.bf16.mxu0 %v1203
    %1340 = vmatpush1.bf16.msra.mxu0 %v1202
    %1341 = vmatprep.subr.bf16.mxu0 %v1205
    %1342 = vmatpush1.bf16.msra.mxu0 %v1204
    %1343 = vmatprep.subr.bf16.mxu0 %v1207
    %1344 = vmatpush1.bf16.msra.mxu0 %v1206
    %1345 = vmatprep.subr.bf16.mxu0 %v1209
    %1346 = vmatpush1.bf16.msra.mxu0 %v1208
    %1347 = vmatprep.subr.bf16.mxu0 %v1211
    %1348 = vmatpush1.bf16.msra.mxu0 %v1210
    %1349 = vmatprep.subr.bf16.mxu0 %v1213
    %1350 = vmatpush1.bf16.msra.mxu0 %v1212
    %1351 = vmatprep.subr.bf16.mxu0 %v1215
    %1352 = vmatpush1.bf16.msra.mxu0 %v1214
    %1353 = vmatprep.subr.bf16.mxu0 %v1217
    %1354 = vmatpush1.bf16.msra.mxu0 %v1216
    %1355 = vmatprep.subr.bf16.mxu0 %v1219
    %1356 = vmatpush1.bf16.msra.mxu0 %v1218
    %1357 = vmatprep.subr.bf16.mxu0 %v1221
    %1358 = vmatpush1.bf16.msra.mxu0 %v1220
    %1359 = vmatprep.subr.bf16.mxu0 %v1223
    %1360 = vmatpush1.bf16.msra.mxu0 %v1222
    %1361 = vmatprep.subr.bf16.mxu0 %v1225
    %1362 = vmatpush1.bf16.msra.mxu0 %v1224
    %1363 = vmatprep.subr.bf16.mxu0 %v1227
    %1364 = vmatpush1.bf16.msra.mxu0 %v1226
    %1365 = vmatprep.subr.bf16.mxu0 %v1229
    %1366 = vmatpush1.bf16.msra.mxu0 %v1228
    %1367 = vmatprep.subr.bf16.mxu0 %v1231
    %1368 = vmatpush1.bf16.msra.mxu0 %v1230
    %1369 = vmatprep.subr.bf16.mxu0 %v1233
    %1370 = vmatpush1.bf16.msra.mxu0 %v1232
    %1371 = vmatprep.mubr.bf16.mxu0 %v901
    %1372 = vmatmul.mubr.bf16.gmra.mrb[0].mxu0 %v900
    %v1373 = vpop.f32.mrb[0].mxu0
    %v1374 = vadd.f32 %v1333, %v1373
    %v1375 = vpop.f32.mrb[0].mxu0
    %v1376 = vadd.f32 %v1335, %v1375
    %v1377 = vpop.f32.mrb[0].mxu0
    %v1378 = vpop.f32.mrb[0].mxu0
    %1379 = vdwg.mxu0
    %vm1380 = vcmp.ge.f32.partialorder %v1374, 0.0
    %vm1381 = vcmp.ge.f32.partialorder %v1376, 0.0
    %v1382 = vmul.f32 %v1374, 0.2
    %v1383 = vmul.f32 %v1376, 0.2
    %v1384 = vsel %vm1380, %v1374, %v1382
    %v1385 = vsel %vm1381, %v1376, %v1383
    %v1386 = vpack.c.bf16 %v1384, %v1384
    %v1387 = vpack.c.bf16 %v1385, %v1385
    %v1388 = vld [vmem:[#allocation11] sm:$0xf]
    %v1389 = vld [vmem:[#allocation11 + $0x4] sm:$0xf]
    %v1390 = vld [vmem:[#allocation11 + $0x8] sm:$0xf]
    %v1391 = vld [vmem:[#allocation11 + $0xc] sm:$0xf]
    %v1392 = vld [vmem:[#allocation11 + $0x10] sm:$0xf]
    %v1393 = vld [vmem:[#allocation11 + $0x14] sm:$0xf]
    %v1394 = vld [vmem:[#allocation11 + $0x18] sm:$0xf]
    %v1395 = vld [vmem:[#allocation11 + $0x1c] sm:$0xf]
    %v1396 = vld [vmem:[#allocation11 + $0x20] sm:$0xf]
    %v1397 = vld [vmem:[#allocation11 + $0x24] sm:$0xf]
    %v1398 = vld [vmem:[#allocation11 + $0x28] sm:$0xf]
    %v1399 = vld [vmem:[#allocation11 + $0x2c] sm:$0xf]
    %v1400 = vld [vmem:[#allocation11 + $0x30] sm:$0xf]
    %v1401 = vld [vmem:[#allocation11 + $0x34] sm:$0xf]
    %v1402 = vld [vmem:[#allocation11 + $0x38] sm:$0xf]
    %v1403 = vld [vmem:[#allocation11 + $0x3c] sm:$0xf]
    %v1404 = vld [vmem:[#allocation11 + $0x40] sm:$0xf]
    %v1405 = vld [vmem:[#allocation11 + $0x44] sm:$0xf]
    %v1406 = vld [vmem:[#allocation11 + $0x48] sm:$0xf]
    %v1407 = vld [vmem:[#allocation11 + $0x4c] sm:$0xf]
    %v1408 = vld [vmem:[#allocation11 + $0x50] sm:$0xf]
    %v1409 = vld [vmem:[#allocation11 + $0x54] sm:$0xf]
    %v1410 = vld [vmem:[#allocation11 + $0x58] sm:$0xf]
    %v1411 = vld [vmem:[#allocation11 + $0x5c] sm:$0xf]
    %v1412 = vld [vmem:[#allocation11 + $0x60] sm:$0xf]
    %v1413 = vld [vmem:[#allocation11 + $0x64] sm:$0xf]
    %v1414 = vld [vmem:[#allocation11 + $0x68] sm:$0xf]
    %v1415 = vld [vmem:[#allocation11 + $0x6c] sm:$0xf]
    %v1416 = vld [vmem:[#allocation11 + $0x70] sm:$0xf]
    %v1417 = vld [vmem:[#allocation11 + $0x74] sm:$0xf]
    %v1418 = vld [vmem:[#allocation11 + $0x78] sm:$0xf]
    %v1419 = vld [vmem:[#allocation11 + $0x7c] sm:$0xf]
    %v1420 = vld [vmem:[%s6] sm:$0x1]
    %v1422 = vlaneseq
    %v1423 = vshrl.u32 %v1422, 7
    %v1424 = vsub.s32 0, %v1423
    %v1425 = vrot.slane %v1420, %v1424
    %v1459 = vunpack.c.l.b16 %v1388
    %v1460 = vunpack.c.l.b16 %v1389
    %v1461 = vunpack.c.l.b16 %v1390
    %v1462 = vunpack.c.l.b16 %v1391
    %v1463 = vunpack.c.l.b16 %v1392
    %v1464 = vunpack.c.l.b16 %v1393
    %v1465 = vunpack.c.l.b16 %v1394
    %v1466 = vunpack.c.l.b16 %v1395
    %v1467 = vunpack.c.l.b16 %v1396
    %v1468 = vunpack.c.l.b16 %v1397
    %v1469 = vunpack.c.l.b16 %v1398
    %v1470 = vunpack.c.l.b16 %v1399
    %v1471 = vunpack.c.l.b16 %v1400
    %v1472 = vunpack.c.l.b16 %v1401
    %v1473 = vunpack.c.l.b16 %v1402
    %v1474 = vunpack.c.l.b16 %v1403
    %v1475 = vunpack.c.l.b16 %v1404
    %v1476 = vunpack.c.l.b16 %v1405
    %v1477 = vunpack.c.l.b16 %v1406
    %v1478 = vunpack.c.l.b16 %v1407
    %v1479 = vunpack.c.l.b16 %v1408
    %v1480 = vunpack.c.l.b16 %v1409
    %v1481 = vunpack.c.l.b16 %v1410
    %v1482 = vunpack.c.l.b16 %v1411
    %v1483 = vunpack.c.l.b16 %v1412
    %v1484 = vunpack.c.l.b16 %v1413
    %v1485 = vunpack.c.l.b16 %v1414
    %v1486 = vunpack.c.l.b16 %v1415
    %v1487 = vunpack.c.l.b16 %v1416
    %v1488 = vunpack.c.l.b16 %v1417
    %v1489 = vunpack.c.l.b16 %v1418
    %v1490 = vunpack.c.l.b16 %v1419
    %v1491 = vpack.c.b16 %v1460, %v1459
    %v1492 = vpack.c.b16 %v1462, %v1461
    %v1493 = vpack.c.b16 %v1464, %v1463
    %v1494 = vpack.c.b16 %v1466, %v1465
    %v1495 = vpack.c.b16 %v1468, %v1467
    %v1496 = vpack.c.b16 %v1470, %v1469
    %v1497 = vpack.c.b16 %v1472, %v1471
    %v1498 = vpack.c.b16 %v1474, %v1473
    %v1499 = vpack.c.b16 %v1476, %v1475
    %v1500 = vpack.c.b16 %v1478, %v1477
    %v1501 = vpack.c.b16 %v1480, %v1479
    %v1502 = vpack.c.b16 %v1482, %v1481
    %v1503 = vpack.c.b16 %v1484, %v1483
    %v1504 = vpack.c.b16 %v1486, %v1485
    %v1505 = vpack.c.b16 %v1488, %v1487
    %v1506 = vpack.c.b16 %v1490, %v1489
    %1523 = vmatprep.subr.bf16.mxu0 0
    %1524 = vmatpush1.bf16.msra.mxu0 %v1491
    %1525 = vmatprep.subr.bf16.mxu0 0
    %1526 = vmatpush1.bf16.msra.mxu0 %v1492
    %1527 = vmatprep.subr.bf16.mxu0 0
    %1528 = vmatpush1.bf16.msra.mxu0 %v1493
    %1529 = vmatprep.subr.bf16.mxu0 0
    %1530 = vmatpush1.bf16.msra.mxu0 %v1494
    %1531 = vmatprep.subr.bf16.mxu0 0
    %1532 = vmatpush1.bf16.msra.mxu0 %v1495
    %1533 = vmatprep.subr.bf16.mxu0 0
    %1534 = vmatpush1.bf16.msra.mxu0 %v1496
    %1535 = vmatprep.subr.bf16.mxu0 0
    %1536 = vmatpush1.bf16.msra.mxu0 %v1497
    %1537 = vmatprep.subr.bf16.mxu0 0
    %1538 = vmatpush1.bf16.msra.mxu0 %v1498
    %1539 = vmatprep.subr.bf16.mxu0 0
    %1540 = vmatpush1.bf16.msra.mxu0 %v1499
    %1541 = vmatprep.subr.bf16.mxu0 0
    %1542 = vmatpush1.bf16.msra.mxu0 %v1500
    %1543 = vmatprep.subr.bf16.mxu0 0
    %1544 = vmatpush1.bf16.msra.mxu0 %v1501
    %1545 = vmatprep.subr.bf16.mxu0 0
    %1546 = vmatpush1.bf16.msra.mxu0 %v1502
    %1547 = vmatprep.subr.bf16.mxu0 0
    %1548 = vmatpush1.bf16.msra.mxu0 %v1503
    %1549 = vmatprep.subr.bf16.mxu0 0
    %1550 = vmatpush1.bf16.msra.mxu0 %v1504
    %1551 = vmatprep.subr.bf16.mxu0 0
    %1552 = vmatpush1.bf16.msra.mxu0 %v1505
    %1553 = vmatprep.subr.bf16.mxu0 0
    %1554 = vmatpush1.bf16.msra.mxu0 %v1506
    %1555 = vmatprep.mubr.bf16.mxu0 %v1387
    %1556 = vmatmul.mubr.bf16.gmra.mrb[0].mxu0 %v1386
    %v1557 = vpop.f32.mrb[0].mxu0
    %v1558 = vadd.f32 %v1425, %v1557
    %v1559 = vpop.f32.mrb[0].mxu0
    %v1560 = vpop.f32.mrb[0].mxu0
    %v1561 = vpop.f32.mrb[0].mxu0
    %1562 = vdwg.mxu0
    %vm1563 = vcmp.ge.f32.partialorder %v1558, 0.0
    %v1564 = vmul.f32 %v1558, 0.2
    %v1565 = vsel %vm1563, %v1558, %v1564
    %v1566 = vld [vmem:[%s7] sm:$0x1]
    %v1567 = vpack.c.bf16 %v1565, %v1565
    %s1568 = sld [smem:[#allocation2]]
    %v1569 = vstv %s1568
    %1570 = vmatprep.subr.bf16.mxu0 0
    %1571 = vmatpush1.bf16.xpose.msra.mxu0 %v1567
    %1572 = vmatprep.subr.bf16.mxu0 0
    %1573 = vmatpush1.bf16.xpose.msra.mxu0 0
    %1574 = vmatprep.subr.bf16.mxu0 0
    %1575 = vmatpush1.bf16.xpose.msra.mxu0 0
    %1576 = vmatprep.subr.bf16.mxu0 0
    %1577 = vmatpush1.bf16.xpose.msra.mxu0 0
    %1578 = vmatprep.subr.bf16.mxu0 0
    %1579 = vmatpush1.bf16.xpose.msra.mxu0 0
    %1580 = vmatprep.subr.bf16.mxu0 0
    %1581 = vmatpush1.bf16.xpose.msra.mxu0 0
    %1582 = vmatprep.subr.bf16.mxu0 0
    %1583 = vmatpush1.bf16.xpose.msra.mxu0 0
    %1584 = vmatprep.subr.bf16.mxu0 0
    %1585 = vmatpush1.bf16.xpose.msra.mxu0 0
    %1586 = vmatprep.subr.bf16.mxu0 0
    %1587 = vmatpush1.bf16.xpose.msra.mxu0 0
    %1588 = vmatprep.subr.bf16.mxu0 0
    %1589 = vmatpush1.bf16.xpose.msra.mxu0 0
    %1590 = vmatprep.subr.bf16.mxu0 0
    %1591 = vmatpush1.bf16.xpose.msra.mxu0 0
    %1592 = vmatprep.subr.bf16.mxu0 0
    %1593 = vmatpush1.bf16.xpose.msra.mxu0 0
    %1594 = vmatprep.subr.bf16.mxu0 0
    %1595 = vmatpush1.bf16.xpose.msra.mxu0 0
    %1596 = vmatprep.subr.bf16.mxu0 0
    %1597 = vmatpush1.bf16.xpose.msra.mxu0 0
    %1598 = vmatprep.subr.bf16.mxu0 0
    %1599 = vmatpush1.bf16.xpose.msra.mxu0 0
    %1600 = vmatprep.subr.bf16.mxu0 0
    %1601 = vmatpush1.bf16.xpose.msra.mxu0 0
    %1602 = vmatprep.mubr.bf16.mxu0 0
    %1603 = vmatmul.mubr.bf16.gmra.mrb[0].mxu0 %v1566
    %v1604 = vpop.f32.mrb[0].mxu0
    %v1605 = vadd.f32 %v1569, %v1604
    %v1606 = vpop.f32.mrb[0].mxu0
    %v1607 = vpop.f32.mrb[0].mxu0
    %v1608 = vpop.f32.mrb[0].mxu0
    %1609 = vdwg.mxu0
    %v1610 = vxor.u32 %v1605, 2147483648
    %v1611 = vmul.f32 %v1610, 1.442695
    %v1612 = vpow.pop %v1611
    %v1613 = vadd.f32 %v1612, 1.0
    %v1614 = vrcp.pop %v1613
    %v1615 = vmul.f32 1.0, %v1614
    %vm1616 = vcmask 57344
    %1617 = vst.msk [vmem:[#allocation12] sm:$0x1] %vm1616, %v1615
    // Predicated region
    $region58: #{tpu_custom_call.1} parent=1 // pred_check
      _
    $region59: #{tpu_custom_call.1} parent=1 // pred_check_branch
      %1619 = sbr.rel (0) target = $region61
    $region60: #{tpu_custom_call.1} parent=1 // pred_region
      %s1621 = ssub.s32 16, 16
      %1622 = vsyncadd [#allocation5], %s1621
      %s1624 = sshll.u32 [#allocation12], 4
      %s1625 = int_to_ptr.vmem [resolvable:$true] %s1624
      %1627 = dma.vmem_to_hbm [thread:$0]  %s1625, 16, %s9, [#allocation5]
    $region61: #{tpu_custom_call.1} parent=1 // pred_fallthru
      _
    // Predicated region
    $region62: #{tpu_custom_call.1} parent=1 // pred_check
      _
    $region63: #{tpu_custom_call.1} parent=1 // pred_check_branch
      %1629 = sbr.rel (0) target = $region65
    $region64: #{tpu_custom_call.1} parent=1 // pred_region
      %1630 = dma.done [#allocation5], 16
    $region65: #{tpu_custom_call.1} parent=1 // pred_fallthru
      _
    %1631 = vsyncpa [#allocation4], 1
    %1632 = vsyncpa [#allocation7], 1
    %1633 = vsyncpa [#allocation10], 1
    %1634 = vsyncpa [#allocation5], 1

</llo_original>
